<compile_context>
chip_gen: v7x
topology: tpu7x:2x2x1
jax: 0.10.0
libtpu: 0.0.40
codegen_flags: <defaults>
</compile_context>

<pallas_src>
import numpy as np

import jax
import jax.numpy as jnp
from jax.experimental import pallas as pl
from jax.experimental.pallas import tpu as pltpu


TILE_B = 8   # images per grid step (sublane dim of every in-kernel matmul)


# ----------------------------------------------------------------------------
# small helpers
# ----------------------------------------------------------------------------
def _round_up(v, m):
    return ((v + m - 1) // m) * m


def _pad_axis(x, axis, target):
    if x.shape[axis] == target:
        return x
    pad = [(0, 0)] * x.ndim
    pad[axis] = (0, target - x.shape[axis])
    return jnp.pad(x, pad)


def _resident_spec(shape):
    n = len(shape)
    return pl.BlockSpec(shape, lambda i, _n=n: (0,) * _n)


# ----------------------------------------------------------------------------
# The fused kernel
# ----------------------------------------------------------------------------
def _lenet_fused_kernel(xa_ref, w1b_ref, b1t_ref, w2b_ref, b2t_ref,
                        wf1_ref, bf1_ref, wf2_ref, bf2_ref, wf3_ref, bf3_ref,
                        o_ref):
    """Whole Net forward for one batch tile.

    xa_ref : (28, TB, 28) f32   image rows leading, batch on sublanes, width on lanes
    w1b_ref: (2, 140, 72) bf16  conv1 banded weights, one per pool column tap pj
    b1t_ref: (1, 72)      f32   conv1 bias tiled over the 12 pooled columns
    w2b_ref: (2, 360, 64) bf16  conv2 banded weights, one per pool column tap pj
    b2t_ref: (1, 64)      f32   conv2 bias tiled over the 4 pooled columns
    wf*_ref / bf*_ref           FC weights (zero-padded to 128 lanes), biases
    o_ref  : (TB, 128)    f32   padded logits (first 10 lanes are real)
    """
    tb = o_ref.shape[0]
    f32 = jnp.float32
    bf16 = jnp.bfloat16

    # ---------- Stage 1: conv1 (1->6, 5x5) + ReLU + 2x2 max-pool -------------
    # Load the 28 image rows once; each is a (TB, 28) block.
    rows = [xa_ref[r] for r in range(28)]

    # cb[a][r1*TB + b, w] = image[b, 2*r1 + a, w]   (r1 = pooled row 0..11)
    def col_block(a):
        return jnp.concatenate([rows[2 * r1 + a] for r1 in range(12)], axis=0)

    cb = [col_block(a) for a in range(6)]            # a = pi + ki in 0..5

    p1 = None
    for pi in range(2):                              # pool row tap
        lhs = jnp.concatenate([cb[pi + ki] for ki in range(5)], axis=-1)
        lhs = lhs.astype(bf16)                       # (12*TB, 140)
        for pj in range(2):                          # pool column tap
            t = jnp.dot(lhs, w1b_ref[pj], preferred_element_type=f32)
            p1 = t if p1 is None else jnp.maximum(p1, t)
    # bias + ReLU hoisted out of the tap loop (pool-max first).
    p1 = jnp.maximum(p1 + b1t_ref[...], 0.0)         # (12*TB, 72); lane = c*6+co

    # ---------- Stage 2: conv2 (6->16, 5x5) + ReLU + 2x2 max-pool ------------
    p2 = None
    for pi in range(2):
        cols = []
        for ki in range(5):
            r0 = pi + ki
            blocks = [p1[(2 * s + r0) * tb:(2 * s + r0) * tb + tb, :]
                      for s in range(4)]             # 8-row aligned slices
            cols.append(jnp.concatenate(blocks, axis=0))     # (4*TB, 72)
        lhs = jnp.concatenate(cols, axis=-1).astype(bf16)    # (4*TB, 360)
        for pj in range(2):
            t = jnp.dot(lhs, w2b_ref[pj], preferred_element_type=f32)
            p2 = t if p2 is None else jnp.maximum(p2, t)
    p2 = jnp.maximum(p2 + b2t_ref[...], 0.0)         # (4*TB, 64); lane = t2*16+co2

    # ---------- Stage 3: fc1 + ReLU -> fc2 + ReLU -> fc3 ---------------------
    # feats[b, s2*64 + t2*16 + co2] ; fc1 weight rows are pre-permuted to match.
    feats = jnp.concatenate([p2[s * tb:(s + 1) * tb, :] for s in range(4)],
                            axis=-1)                 # (TB, 256)
    h = jnp.dot(feats.astype(bf16), wf1_ref[...],
                preferred_element_type=f32) + bf1_ref[...]
    h = jnp.maximum(h, 0.0)
    h = jnp.dot(h.astype(bf16), wf2_ref[...],
                preferred_element_type=f32) + bf2_ref[...]
    h = jnp.maximum(h, 0.0)
    y = jnp.dot(h.astype(bf16), wf3_ref[...],
                preferred_element_type=f32) + bf3_ref[...]
    o_ref[...] = y


# ----------------------------------------------------------------------------
# Weight preparation (layout-only, tiny; runs once per jitted call)
# ----------------------------------------------------------------------------
def _build_operands(p):
    f32, bf16 = jnp.float32, jnp.bfloat16

    # conv1 banded weights: w1band[pj][ki*28 + w, c*6 + co] = w1[ki,kj,co]
    # with kj = w - (2c + pj) in [0,5).  Folds the 5x5 kernel + column pooling
    # tap into a single matmul contraction over (ki, image width).
    w1r = p["w1"].reshape(5, 5, 6)                         # (ki, kj, co)
    bands = []
    for pj in range(2):
        band = jnp.zeros((5, 28, 12, 6), f32)
        for c in range(12):
            band = band.at[:, 2 * c + pj:2 * c + pj + 5, c, :].set(w1r)
        bands.append(band.reshape(140, 72))
    w1band = jnp.stack(bands).astype(bf16)                 # (2, 140, 72)
    b1t = jnp.tile(p["b1"], 12).reshape(1, 72).astype(f32)

    # conv2 banded weights: w2band[pj][ki*72 + c*6 + ci, t2*16 + co2]
    #   = w2[ki, kj, ci, co2] with kj = c - (2*t2 + pj) in [0,5).
    w2r = p["w2"].reshape(6, 5, 5, 16).transpose(1, 2, 0, 3)   # (ki,kj,ci,co)
    bands = []
    for pj in range(2):
        band = jnp.zeros((5, 12, 6, 4, 16), f32)
        for t in range(4):
            band = band.at[:, 2 * t + pj:2 * t + pj + 5, :, t, :].set(w2r)
        bands.append(band.reshape(360, 64))
    w2band = jnp.stack(bands).astype(bf16)                 # (2, 360, 64)
    b2t = jnp.tile(p["b2"], 4).reshape(1, 64).astype(f32)

    # FC weights: permute fc1 rows from PyTorch's (co,h,w) flatten order to the
    # kernel's natural (h, w, co) feature order; zero-pad outputs to 128 lanes.
    perm = np.empty((256,), np.int32)
    for s in range(4):
        for t in range(4):
            for co in range(16):
                perm[s * 64 + t * 16 + co] = co * 16 + s * 4 + t
    wf1p = _pad_axis(p["wf1"][perm, :], 1, 128).astype(bf16)       # (256,128)
    wf2p = _pad_axis(_pad_axis(p["wf2"], 0, 128), 1, 128).astype(bf16)
    wf3p = _pad_axis(_pad_axis(p["wf3"], 0, 128), 1, 128).astype(bf16)
    bf1p = _pad_axis(p["bf1"].reshape(1, -1), 1, 128).astype(f32)
    bf2p = _pad_axis(p["bf2"].reshape(1, -1), 1, 128).astype(f32)
    bf3p = _pad_axis(p["bf3"].reshape(1, -1), 1, 128).astype(f32)

    return (w1band, b1t, w2band, b2t, wf1p, bf1p, wf2p, bf2p, wf3p, bf3p)


# ----------------------------------------------------------------------------
# Forward pass (matches PyTorch Net.forward semantics)
# ----------------------------------------------------------------------------
@jax.jit
def net_forward(x, p):
    x = x.astype(jnp.float32)
    if x.ndim == 4:                                   # (B,1,28,28) -> (B,28,28)
        x = x.reshape(x.shape[0], x.shape[-2], x.shape[-1])
    b = x.shape[0]
    assert x.shape[1] == 28 and x.shape[2] == 28, x.shape

    bp = _round_up(max(b, 1), TILE_B)
    if bp != b:
        x = jnp.pad(x, ((0, bp - b), (0, 0), (0, 0)))
    xa = jnp.transpose(x, (1, 0, 2))                  # (28, bp, 28): rows leading

    ops = _build_operands(p)
    steps = bp // TILE_B

    flops_step = 2 * (4 * 12 * TILE_B * 140 * 72      # conv1 taps
                      + 4 * 4 * TILE_B * 360 * 64     # conv2 taps
                      + TILE_B * (256 * 128 + 128 * 128 + 128 * 128))
    bytes_acc = (xa.size * 4 + bp * 128 * 4
                 + sum(int(o.size) * o.dtype.itemsize for o in ops))

    out = pl.pallas_call(
        _lenet_fused_kernel,
        out_shape=jax.ShapeDtypeStruct((bp, 128), jnp.float32),
        grid=(steps,),
        in_specs=[pl.BlockSpec((28, TILE_B, 28), lambda i: (0, i, 0))]
                 + [_resident_spec(o.shape) for o in ops],
        out_specs=pl.BlockSpec((TILE_B, 128), lambda i: (i, 0)),
        compiler_params=pltpu.CompilerParams(
            dimension_semantics=("parallel",)),
        cost_estimate=pl.CostEstimate(flops=flops_step * steps,
                                      transcendentals=0,
                                      bytes_accessed=bytes_acc),
    )(xa, *ops)

    return out[:b, :10]


# ----------------------------------------------------------------------------
# Parameters (deterministic, PyTorch-like uniform(-1/sqrt(fan_in), +...))
# ----------------------------------------------------------------------------
def init_params(key):
    def uni(k, shape, fan_in):
        bound = 1.0 / jnp.sqrt(float(fan_in))
        return jax.random.uniform(k, shape, jnp.float32, -bound, bound)

    ks = jax.random.split(key, 10)
    p = {}
    # conv1: 1 -> 6, 5x5   (im2col layout (kh*kw, out))
    p["w1"] = uni(ks[0], (1 * 5 * 5, 6), 1 * 5 * 5)
    p["b1"] = uni(ks[1], (6,), 1 * 5 * 5)
    # conv2: 6 -> 16, 5x5  (im2col layout (in*kh*kw, out), (ci,kh,kw) row order)
    p["w2"] = uni(ks[2], (6 * 5 * 5, 16), 6 * 5 * 5)
    p["b2"] = uni(ks[3], (16,), 6 * 5 * 5)
    # fc1: 256 -> 120 (rows in PyTorch flatten order co*16 + h*4 + w)
    p["wf1"] = uni(ks[4], (16 * 4 * 4, 120), 16 * 4 * 4)
    p["bf1"] = uni(ks[5], (120,), 16 * 4 * 4)
    # fc2: 120 -> 84
    p["wf2"] = uni(ks[6], (120, 84), 120)
    p["bf2"] = uni(ks[7], (84,), 120)
    # fc3: 84 -> 10
    p["wf3"] = uni(ks[8], (84, 10), 84)
    p["bf3"] = uni(ks[9], (10,), 84)
    return p


# ----------------------------------------------------------------------------
# Pure-JAX f32 reference (for a sanity check of the fused bf16 kernel)
# ----------------------------------------------------------------------------
def net_reference(x, p):
    xf = x.astype(jnp.float32)
    if xf.ndim == 3:
        xf = xf[:, None]
    w1 = jnp.transpose(p["w1"].reshape(5, 5, 6), (2, 0, 1))[:, None]   # (6,1,5,5)
    w2 = jnp.transpose(p["w2"].reshape(6, 5, 5, 16), (3, 0, 1, 2))     # (16,6,5,5)
    dn = ("NCHW", "OIHW", "NCHW")

    def conv_relu(v, w, bias):
        y = jax.lax.conv_general_dilated(v, w, (1, 1), "VALID",
                                         dimension_numbers=dn)
        return jax.nn.relu(y + bias[None, :, None, None])

    def pool(v):
        return jax.lax.reduce_window(v, -jnp.inf, jax.lax.max,
                                     (1, 1, 2, 2), (1, 1, 2, 2), "VALID")

    y = pool(conv_relu(xf, w1, p["b1"]))
    y = pool(conv_relu(y, w2, p["b2"]))
    feats = y.reshape(y.shape[0], 256)
    h = jax.nn.relu(feats @ p["wf1"] + p["bf1"])
    h = jax.nn.relu(h @ p["wf2"] + p["bf2"])
    return h @ p["wf3"] + p["bf3"]


if __name__ == "__main__":
    key = jax.random.PRNGKey(0)
    k_params, k_x = jax.random.split(key)
    params = init_params(k_params)
    # The architecture (16*4*4 flatten) implies 28x28 single-channel input.
    x = jax.random.normal(k_x, (2, 1, 28, 28), dtype=jnp.float32)

    out = jax.block_until_ready(net_forward(x, params))
    assert out.shape == (2, 10), out.shape
    assert out.dtype == jnp.float32
    assert bool(jnp.all(jnp.isfinite(out)))

    # Sanity check of the fused bf16-MXU kernel against an f32 XLA reference.
    ref = net_reference(x, params)
    err = float(jnp.max(jnp.abs(out - ref)))
    assert err < 0.1, f"mismatch vs f32 reference: max abs err {err}"

    print("KERNEL_OK")
</pallas_src>

<mosaic_0001>
module attributes {stable_mosaic.version = 11 : i64} {
  func.func @_lenet_fused_kernel(%arg0: i32, %arg1: memref<28x8x28xf32, #tpu.memory_space<vmem>>, %arg2: memref<2x140x72xbf16, #tpu.memory_space<vmem>>, %arg3: memref<1x72xf32, #tpu.memory_space<vmem>>, %arg4: memref<2x360x64xbf16, #tpu.memory_space<vmem>>, %arg5: memref<1x64xf32, #tpu.memory_space<vmem>>, %arg6: memref<256x128xbf16, #tpu.memory_space<vmem>>, %arg7: memref<1x128xf32, #tpu.memory_space<vmem>>, %arg8: memref<128x128xbf16, #tpu.memory_space<vmem>>, %arg9: memref<1x128xf32, #tpu.memory_space<vmem>>, %arg10: memref<128x128xbf16, #tpu.memory_space<vmem>>, %arg11: memref<1x128xf32, #tpu.memory_space<vmem>>, %arg12: memref<8x128xf32, #tpu.memory_space<vmem>>) attributes {dimension_semantics = [#tpu.dimension_semantics<parallel>], iteration_bounds = array<i64: 1>, scalar_prefetch = 0 : i64, scratch_operands = 0 : i64, tpu.core_type = #tpu.core_type<tc>, window_params = [{transform_indices = @transform_0, window_bounds = array<i64: 28, 8, 28>}, {pipeline_mode = #tpu.pipeline_mode<synchronous>, transform_indices = @transform_1, window_bounds = array<i64: 2, 140, 72>}, {pipeline_mode = #tpu.pipeline_mode<synchronous>, transform_indices = @transform_2, window_bounds = array<i64: 1, 72>}, {pipeline_mode = #tpu.pipeline_mode<synchronous>, transform_indices = @transform_3, window_bounds = array<i64: 2, 360, 64>}, {pipeline_mode = #tpu.pipeline_mode<synchronous>, transform_indices = @transform_4, window_bounds = array<i64: 1, 64>}, {pipeline_mode = #tpu.pipeline_mode<synchronous>, transform_indices = @transform_5, window_bounds = array<i64: 256, 128>}, {pipeline_mode = #tpu.pipeline_mode<synchronous>, transform_indices = @transform_6, window_bounds = array<i64: 1, 128>}, {pipeline_mode = #tpu.pipeline_mode<synchronous>, transform_indices = @transform_7, window_bounds = array<i64: 128, 128>}, {pipeline_mode = #tpu.pipeline_mode<synchronous>, transform_indices = @transform_8, window_bounds = array<i64: 1, 128>}, {pipeline_mode = #tpu.pipeline_mode<synchronous>, transform_indices = @transform_9, window_bounds = array<i64: 128, 128>}, {pipeline_mode = #tpu.pipeline_mode<synchronous>, transform_indices = @transform_10, window_bounds = array<i64: 1, 128>}, {transform_indices = @transform_11, window_bounds = array<i64: 8, 128>}]} {
    %c0 = arith.constant 0 : index
    %c0_0 = arith.constant 0 : index
    %c0_1 = arith.constant 0 : index
    %0 = vector.load %arg1[%c0, %c0_0, %c0_1] : memref<28x8x28xf32, #tpu.memory_space<vmem>>, vector<1x8x28xf32>
    %1 = vector.shape_cast %0 : vector<1x8x28xf32> to vector<8x28xf32>
    %c1 = arith.constant 1 : index
    %c0_2 = arith.constant 0 : index
    %c0_3 = arith.constant 0 : index
    %2 = vector.load %arg1[%c1, %c0_2, %c0_3] : memref<28x8x28xf32, #tpu.memory_space<vmem>>, vector<1x8x28xf32>
    %3 = vector.shape_cast %2 : vector<1x8x28xf32> to vector<8x28xf32>
    %c2 = arith.constant 2 : index
    %c0_4 = arith.constant 0 : index
    %c0_5 = arith.constant 0 : index
    %4 = vector.load %arg1[%c2, %c0_4, %c0_5] : memref<28x8x28xf32, #tpu.memory_space<vmem>>, vector<1x8x28xf32>
    %5 = vector.shape_cast %4 : vector<1x8x28xf32> to vector<8x28xf32>
    %c3 = arith.constant 3 : index
    %c0_6 = arith.constant 0 : index
    %c0_7 = arith.constant 0 : index
    %6 = vector.load %arg1[%c3, %c0_6, %c0_7] : memref<28x8x28xf32, #tpu.memory_space<vmem>>, vector<1x8x28xf32>
    %7 = vector.shape_cast %6 : vector<1x8x28xf32> to vector<8x28xf32>
    %c4 = arith.constant 4 : index
    %c0_8 = arith.constant 0 : index
    %c0_9 = arith.constant 0 : index
    %8 = vector.load %arg1[%c4, %c0_8, %c0_9] : memref<28x8x28xf32, #tpu.memory_space<vmem>>, vector<1x8x28xf32>
    %9 = vector.shape_cast %8 : vector<1x8x28xf32> to vector<8x28xf32>
    %c5 = arith.constant 5 : index
    %c0_10 = arith.constant 0 : index
    %c0_11 = arith.constant 0 : index
    %10 = vector.load %arg1[%c5, %c0_10, %c0_11] : memref<28x8x28xf32, #tpu.memory_space<vmem>>, vector<1x8x28xf32>
    %11 = vector.shape_cast %10 : vector<1x8x28xf32> to vector<8x28xf32>
    %c6 = arith.constant 6 : index
    %c0_12 = arith.constant 0 : index
    %c0_13 = arith.constant 0 : index
    %12 = vector.load %arg1[%c6, %c0_12, %c0_13] : memref<28x8x28xf32, #tpu.memory_space<vmem>>, vector<1x8x28xf32>
    %13 = vector.shape_cast %12 : vector<1x8x28xf32> to vector<8x28xf32>
    %c7 = arith.constant 7 : index
    %c0_14 = arith.constant 0 : index
    %c0_15 = arith.constant 0 : index
    %14 = vector.load %arg1[%c7, %c0_14, %c0_15] : memref<28x8x28xf32, #tpu.memory_space<vmem>>, vector<1x8x28xf32>
    %15 = vector.shape_cast %14 : vector<1x8x28xf32> to vector<8x28xf32>
    %c8 = arith.constant 8 : index
    %c0_16 = arith.constant 0 : index
    %c0_17 = arith.constant 0 : index
    %16 = vector.load %arg1[%c8, %c0_16, %c0_17] : memref<28x8x28xf32, #tpu.memory_space<vmem>>, vector<1x8x28xf32>
    %17 = vector.shape_cast %16 : vector<1x8x28xf32> to vector<8x28xf32>
    %c9 = arith.constant 9 : index
    %c0_18 = arith.constant 0 : index
    %c0_19 = arith.constant 0 : index
    %18 = vector.load %arg1[%c9, %c0_18, %c0_19] : memref<28x8x28xf32, #tpu.memory_space<vmem>>, vector<1x8x28xf32>
    %19 = vector.shape_cast %18 : vector<1x8x28xf32> to vector<8x28xf32>
    %c10 = arith.constant 10 : index
    %c0_20 = arith.constant 0 : index
    %c0_21 = arith.constant 0 : index
    %20 = vector.load %arg1[%c10, %c0_20, %c0_21] : memref<28x8x28xf32, #tpu.memory_space<vmem>>, vector<1x8x28xf32>
    %21 = vector.shape_cast %20 : vector<1x8x28xf32> to vector<8x28xf32>
    %c11 = arith.constant 11 : index
    %c0_22 = arith.constant 0 : index
    %c0_23 = arith.constant 0 : index
    %22 = vector.load %arg1[%c11, %c0_22, %c0_23] : memref<28x8x28xf32, #tpu.memory_space<vmem>>, vector<1x8x28xf32>
    %23 = vector.shape_cast %22 : vector<1x8x28xf32> to vector<8x28xf32>
    %c12 = arith.constant 12 : index
    %c0_24 = arith.constant 0 : index
    %c0_25 = arith.constant 0 : index
    %24 = vector.load %arg1[%c12, %c0_24, %c0_25] : memref<28x8x28xf32, #tpu.memory_space<vmem>>, vector<1x8x28xf32>
    %25 = vector.shape_cast %24 : vector<1x8x28xf32> to vector<8x28xf32>
    %c13 = arith.constant 13 : index
    %c0_26 = arith.constant 0 : index
    %c0_27 = arith.constant 0 : index
    %26 = vector.load %arg1[%c13, %c0_26, %c0_27] : memref<28x8x28xf32, #tpu.memory_space<vmem>>, vector<1x8x28xf32>
    %27 = vector.shape_cast %26 : vector<1x8x28xf32> to vector<8x28xf32>
    %c14 = arith.constant 14 : index
    %c0_28 = arith.constant 0 : index
    %c0_29 = arith.constant 0 : index
    %28 = vector.load %arg1[%c14, %c0_28, %c0_29] : memref<28x8x28xf32, #tpu.memory_space<vmem>>, vector<1x8x28xf32>
    %29 = vector.shape_cast %28 : vector<1x8x28xf32> to vector<8x28xf32>
    %c15 = arith.constant 15 : index
    %c0_30 = arith.constant 0 : index
    %c0_31 = arith.constant 0 : index
    %30 = vector.load %arg1[%c15, %c0_30, %c0_31] : memref<28x8x28xf32, #tpu.memory_space<vmem>>, vector<1x8x28xf32>
    %31 = vector.shape_cast %30 : vector<1x8x28xf32> to vector<8x28xf32>
    %c16 = arith.constant 16 : index
    %c0_32 = arith.constant 0 : index
    %c0_33 = arith.constant 0 : index
    %32 = vector.load %arg1[%c16, %c0_32, %c0_33] : memref<28x8x28xf32, #tpu.memory_space<vmem>>, vector<1x8x28xf32>
    %33 = vector.shape_cast %32 : vector<1x8x28xf32> to vector<8x28xf32>
    %c17 = arith.constant 17 : index
    %c0_34 = arith.constant 0 : index
    %c0_35 = arith.constant 0 : index
    %34 = vector.load %arg1[%c17, %c0_34, %c0_35] : memref<28x8x28xf32, #tpu.memory_space<vmem>>, vector<1x8x28xf32>
    %35 = vector.shape_cast %34 : vector<1x8x28xf32> to vector<8x28xf32>
    %c18 = arith.constant 18 : index
    %c0_36 = arith.constant 0 : index
    %c0_37 = arith.constant 0 : index
    %36 = vector.load %arg1[%c18, %c0_36, %c0_37] : memref<28x8x28xf32, #tpu.memory_space<vmem>>, vector<1x8x28xf32>
    %37 = vector.shape_cast %36 : vector<1x8x28xf32> to vector<8x28xf32>
    %c19 = arith.constant 19 : index
    %c0_38 = arith.constant 0 : index
    %c0_39 = arith.constant 0 : index
    %38 = vector.load %arg1[%c19, %c0_38, %c0_39] : memref<28x8x28xf32, #tpu.memory_space<vmem>>, vector<1x8x28xf32>
    %39 = vector.shape_cast %38 : vector<1x8x28xf32> to vector<8x28xf32>
    %c20 = arith.constant 20 : index
    %c0_40 = arith.constant 0 : index
    %c0_41 = arith.constant 0 : index
    %40 = vector.load %arg1[%c20, %c0_40, %c0_41] : memref<28x8x28xf32, #tpu.memory_space<vmem>>, vector<1x8x28xf32>
    %41 = vector.shape_cast %40 : vector<1x8x28xf32> to vector<8x28xf32>
    %c21 = arith.constant 21 : index
    %c0_42 = arith.constant 0 : index
    %c0_43 = arith.constant 0 : index
    %42 = vector.load %arg1[%c21, %c0_42, %c0_43] : memref<28x8x28xf32, #tpu.memory_space<vmem>>, vector<1x8x28xf32>
    %43 = vector.shape_cast %42 : vector<1x8x28xf32> to vector<8x28xf32>
    %c22 = arith.constant 22 : index
    %c0_44 = arith.constant 0 : index
    %c0_45 = arith.constant 0 : index
    %44 = vector.load %arg1[%c22, %c0_44, %c0_45] : memref<28x8x28xf32, #tpu.memory_space<vmem>>, vector<1x8x28xf32>
    %45 = vector.shape_cast %44 : vector<1x8x28xf32> to vector<8x28xf32>
    %c23 = arith.constant 23 : index
    %c0_46 = arith.constant 0 : index
    %c0_47 = arith.constant 0 : index
    %46 = vector.load %arg1[%c23, %c0_46, %c0_47] : memref<28x8x28xf32, #tpu.memory_space<vmem>>, vector<1x8x28xf32>
    %47 = vector.shape_cast %46 : vector<1x8x28xf32> to vector<8x28xf32>
    %c24 = arith.constant 24 : index
    %c0_48 = arith.constant 0 : index
    %c0_49 = arith.constant 0 : index
    %48 = vector.load %arg1[%c24, %c0_48, %c0_49] : memref<28x8x28xf32, #tpu.memory_space<vmem>>, vector<1x8x28xf32>
    %49 = vector.shape_cast %48 : vector<1x8x28xf32> to vector<8x28xf32>
    %c25 = arith.constant 25 : index
    %c0_50 = arith.constant 0 : index
    %c0_51 = arith.constant 0 : index
    %50 = vector.load %arg1[%c25, %c0_50, %c0_51] : memref<28x8x28xf32, #tpu.memory_space<vmem>>, vector<1x8x28xf32>
    %51 = vector.shape_cast %50 : vector<1x8x28xf32> to vector<8x28xf32>
    %c26 = arith.constant 26 : index
    %c0_52 = arith.constant 0 : index
    %c0_53 = arith.constant 0 : index
    %52 = vector.load %arg1[%c26, %c0_52, %c0_53] : memref<28x8x28xf32, #tpu.memory_space<vmem>>, vector<1x8x28xf32>
    %53 = vector.shape_cast %52 : vector<1x8x28xf32> to vector<8x28xf32>
    %c27 = arith.constant 27 : index
    %c0_54 = arith.constant 0 : index
    %c0_55 = arith.constant 0 : index
    %54 = vector.load %arg1[%c27, %c0_54, %c0_55] : memref<28x8x28xf32, #tpu.memory_space<vmem>>, vector<1x8x28xf32>
    %55 = vector.shape_cast %54 : vector<1x8x28xf32> to vector<8x28xf32>
    %56 = tpu.concatenate %1, %5, %9, %13, %17, %21, %25, %29, %33, %37, %41, %45 in 0 : vector<8x28xf32>, vector<8x28xf32>, vector<8x28xf32>, vector<8x28xf32>, vector<8x28xf32>, vector<8x28xf32>, vector<8x28xf32>, vector<8x28xf32>, vector<8x28xf32>, vector<8x28xf32>, vector<8x28xf32>, vector<8x28xf32> -> vector<96x28xf32>
    %57 = tpu.concatenate %3, %7, %11, %15, %19, %23, %27, %31, %35, %39, %43, %47 in 0 : vector<8x28xf32>, vector<8x28xf32>, vector<8x28xf32>, vector<8x28xf32>, vector<8x28xf32>, vector<8x28xf32>, vector<8x28xf32>, vector<8x28xf32>, vector<8x28xf32>, vector<8x28xf32>, vector<8x28xf32>, vector<8x28xf32> -> vector<96x28xf32>
    %58 = tpu.concatenate %5, %9, %13, %17, %21, %25, %29, %33, %37, %41, %45, %49 in 0 : vector<8x28xf32>, vector<8x28xf32>, vector<8x28xf32>, vector<8x28xf32>, vector<8x28xf32>, vector<8x28xf32>, vector<8x28xf32>, vector<8x28xf32>, vector<8x28xf32>, vector<8x28xf32>, vector<8x28xf32>, vector<8x28xf32> -> vector<96x28xf32>
    %59 = tpu.concatenate %7, %11, %15, %19, %23, %27, %31, %35, %39, %43, %47, %51 in 0 : vector<8x28xf32>, vector<8x28xf32>, vector<8x28xf32>, vector<8x28xf32>, vector<8x28xf32>, vector<8x28xf32>, vector<8x28xf32>, vector<8x28xf32>, vector<8x28xf32>, vector<8x28xf32>, vector<8x28xf32>, vector<8x28xf32> -> vector<96x28xf32>
    %60 = tpu.concatenate %9, %13, %17, %21, %25, %29, %33, %37, %41, %45, %49, %53 in 0 : vector<8x28xf32>, vector<8x28xf32>, vector<8x28xf32>, vector<8x28xf32>, vector<8x28xf32>, vector<8x28xf32>, vector<8x28xf32>, vector<8x28xf32>, vector<8x28xf32>, vector<8x28xf32>, vector<8x28xf32>, vector<8x28xf32> -> vector<96x28xf32>
    %61 = tpu.concatenate %11, %15, %19, %23, %27, %31, %35, %39, %43, %47, %51, %55 in 0 : vector<8x28xf32>, vector<8x28xf32>, vector<8x28xf32>, vector<8x28xf32>, vector<8x28xf32>, vector<8x28xf32>, vector<8x28xf32>, vector<8x28xf32>, vector<8x28xf32>, vector<8x28xf32>, vector<8x28xf32>, vector<8x28xf32> -> vector<96x28xf32>
    %62 = tpu.concatenate %56, %57, %58, %59, %60 in 1 : vector<96x28xf32>, vector<96x28xf32>, vector<96x28xf32>, vector<96x28xf32>, vector<96x28xf32> -> vector<96x140xf32>
    %63 = arith.truncf %62 : vector<96x140xf32> to vector<96x140xbf16>
    %c0_56 = arith.constant 0 : index
    %c0_57 = arith.constant 0 : index
    %c0_58 = arith.constant 0 : index
    %64 = vector.load %arg2[%c0_56, %c0_57, %c0_58] : memref<2x140x72xbf16, #tpu.memory_space<vmem>>, vector<1x140x72xbf16>
    %65 = vector.shape_cast %64 : vector<1x140x72xbf16> to vector<140x72xbf16>
    %cst = arith.constant dense<0.000000e+00> : vector<96x72xf32>
    %66 = tpu.matmul %63, %65, %cst {dimension_numbers = #tpu.dot_dimension_numbers<[1], [0], [0], [1], [0, 0, 1, 1], [], []>} : vector<96x140xbf16>, vector<140x72xbf16>, vector<96x72xf32> -> vector<96x72xf32>
    %c1_59 = arith.constant 1 : index
    %c0_60 = arith.constant 0 : index
    %c0_61 = arith.constant 0 : index
    %67 = vector.load %arg2[%c1_59, %c0_60, %c0_61] : memref<2x140x72xbf16, #tpu.memory_space<vmem>>, vector<1x140x72xbf16>
    %68 = vector.shape_cast %67 : vector<1x140x72xbf16> to vector<140x72xbf16>
    %cst_62 = arith.constant dense<0.000000e+00> : vector<96x72xf32>
    %69 = tpu.matmul %63, %68, %cst_62 {dimension_numbers = #tpu.dot_dimension_numbers<[1], [0], [0], [1], [0, 0, 1, 1], [], []>} : vector<96x140xbf16>, vector<140x72xbf16>, vector<96x72xf32> -> vector<96x72xf32>
    %70 = arith.maximumf %66, %69 : vector<96x72xf32>
    %71 = tpu.concatenate %57, %58, %59, %60, %61 in 1 : vector<96x28xf32>, vector<96x28xf32>, vector<96x28xf32>, vector<96x28xf32>, vector<96x28xf32> -> vector<96x140xf32>
    %72 = arith.truncf %71 : vector<96x140xf32> to vector<96x140xbf16>
    %c0_63 = arith.constant 0 : index
    %c0_64 = arith.constant 0 : index
    %c0_65 = arith.constant 0 : index
    %73 = vector.load %arg2[%c0_63, %c0_64, %c0_65] : memref<2x140x72xbf16, #tpu.memory_space<vmem>>, vector<1x140x72xbf16>
    %74 = vector.shape_cast %73 : vector<1x140x72xbf16> to vector<140x72xbf16>
    %cst_66 = arith.constant dense<0.000000e+00> : vector<96x72xf32>
    %75 = tpu.matmul %72, %74, %cst_66 {dimension_numbers = #tpu.dot_dimension_numbers<[1], [0], [0], [1], [0, 0, 1, 1], [], []>} : vector<96x140xbf16>, vector<140x72xbf16>, vector<96x72xf32> -> vector<96x72xf32>
    %76 = arith.maximumf %70, %75 : vector<96x72xf32>
    %c1_67 = arith.constant 1 : index
    %c0_68 = arith.constant 0 : index
    %c0_69 = arith.constant 0 : index
    %77 = vector.load %arg2[%c1_67, %c0_68, %c0_69] : memref<2x140x72xbf16, #tpu.memory_space<vmem>>, vector<1x140x72xbf16>
    %78 = vector.shape_cast %77 : vector<1x140x72xbf16> to vector<140x72xbf16>
    %cst_70 = arith.constant dense<0.000000e+00> : vector<96x72xf32>
    %79 = tpu.matmul %72, %78, %cst_70 {dimension_numbers = #tpu.dot_dimension_numbers<[1], [0], [0], [1], [0, 0, 1, 1], [], []>} : vector<96x140xbf16>, vector<140x72xbf16>, vector<96x72xf32> -> vector<96x72xf32>
    %80 = arith.maximumf %76, %79 : vector<96x72xf32>
    %c0_71 = arith.constant 0 : index
    %c0_72 = arith.constant 0 : index
    %81 = vector.load %arg3[%c0_71, %c0_72] : memref<1x72xf32, #tpu.memory_space<vmem>>, vector<1x72xf32>
    %82 = vector.broadcast %81 : vector<1x72xf32> to vector<96x72xf32>
    %83 = arith.addf %80, %82 : vector<96x72xf32>
    %cst_73 = arith.constant 0.000000e+00 : f32
    %84 = vector.broadcast %cst_73 : f32 to vector<96x72xf32>
    %85 = arith.maximumf %83, %84 : vector<96x72xf32>
    %86 = vector.extract_strided_slice %85 {offsets = [0, 0], sizes = [8, 72], strides = [1, 1]} : vector<96x72xf32> to vector<8x72xf32>
    %87 = vector.extract_strided_slice %85 {offsets = [16, 0], sizes = [8, 72], strides = [1, 1]} : vector<96x72xf32> to vector<8x72xf32>
    %88 = vector.extract_strided_slice %85 {offsets = [32, 0], sizes = [8, 72], strides = [1, 1]} : vector<96x72xf32> to vector<8x72xf32>
    %89 = vector.extract_strided_slice %85 {offsets = [48, 0], sizes = [8, 72], strides = [1, 1]} : vector<96x72xf32> to vector<8x72xf32>
    %90 = tpu.concatenate %86, %87, %88, %89 in 0 : vector<8x72xf32>, vector<8x72xf32>, vector<8x72xf32>, vector<8x72xf32> -> vector<32x72xf32>
    %91 = vector.extract_strided_slice %85 {offsets = [8, 0], sizes = [8, 72], strides = [1, 1]} : vector<96x72xf32> to vector<8x72xf32>
    %92 = vector.extract_strided_slice %85 {offsets = [24, 0], sizes = [8, 72], strides = [1, 1]} : vector<96x72xf32> to vector<8x72xf32>
    %93 = vector.extract_strided_slice %85 {offsets = [40, 0], sizes = [8, 72], strides = [1, 1]} : vector<96x72xf32> to vector<8x72xf32>
    %94 = vector.extract_strided_slice %85 {offsets = [56, 0], sizes = [8, 72], strides = [1, 1]} : vector<96x72xf32> to vector<8x72xf32>
    %95 = tpu.concatenate %91, %92, %93, %94 in 0 : vector<8x72xf32>, vector<8x72xf32>, vector<8x72xf32>, vector<8x72xf32> -> vector<32x72xf32>
    %96 = vector.extract_strided_slice %85 {offsets = [16, 0], sizes = [8, 72], strides = [1, 1]} : vector<96x72xf32> to vector<8x72xf32>
    %97 = vector.extract_strided_slice %85 {offsets = [32, 0], sizes = [8, 72], strides = [1, 1]} : vector<96x72xf32> to vector<8x72xf32>
    %98 = vector.extract_strided_slice %85 {offsets = [48, 0], sizes = [8, 72], strides = [1, 1]} : vector<96x72xf32> to vector<8x72xf32>
    %99 = vector.extract_strided_slice %85 {offsets = [64, 0], sizes = [8, 72], strides = [1, 1]} : vector<96x72xf32> to vector<8x72xf32>
    %100 = tpu.concatenate %96, %97, %98, %99 in 0 : vector<8x72xf32>, vector<8x72xf32>, vector<8x72xf32>, vector<8x72xf32> -> vector<32x72xf32>
    %101 = vector.extract_strided_slice %85 {offsets = [24, 0], sizes = [8, 72], strides = [1, 1]} : vector<96x72xf32> to vector<8x72xf32>
    %102 = vector.extract_strided_slice %85 {offsets = [40, 0], sizes = [8, 72], strides = [1, 1]} : vector<96x72xf32> to vector<8x72xf32>
    %103 = vector.extract_strided_slice %85 {offsets = [56, 0], sizes = [8, 72], strides = [1, 1]} : vector<96x72xf32> to vector<8x72xf32>
    %104 = vector.extract_strided_slice %85 {offsets = [72, 0], sizes = [8, 72], strides = [1, 1]} : vector<96x72xf32> to vector<8x72xf32>
    %105 = tpu.concatenate %101, %102, %103, %104 in 0 : vector<8x72xf32>, vector<8x72xf32>, vector<8x72xf32>, vector<8x72xf32> -> vector<32x72xf32>
    %106 = vector.extract_strided_slice %85 {offsets = [32, 0], sizes = [8, 72], strides = [1, 1]} : vector<96x72xf32> to vector<8x72xf32>
    %107 = vector.extract_strided_slice %85 {offsets = [48, 0], sizes = [8, 72], strides = [1, 1]} : vector<96x72xf32> to vector<8x72xf32>
    %108 = vector.extract_strided_slice %85 {offsets = [64, 0], sizes = [8, 72], strides = [1, 1]} : vector<96x72xf32> to vector<8x72xf32>
    %109 = vector.extract_strided_slice %85 {offsets = [80, 0], sizes = [8, 72], strides = [1, 1]} : vector<96x72xf32> to vector<8x72xf32>
    %110 = tpu.concatenate %106, %107, %108, %109 in 0 : vector<8x72xf32>, vector<8x72xf32>, vector<8x72xf32>, vector<8x72xf32> -> vector<32x72xf32>
    %111 = tpu.concatenate %90, %95, %100, %105, %110 in 1 : vector<32x72xf32>, vector<32x72xf32>, vector<32x72xf32>, vector<32x72xf32>, vector<32x72xf32> -> vector<32x360xf32>
    %112 = arith.truncf %111 : vector<32x360xf32> to vector<32x360xbf16>
    %c0_74 = arith.constant 0 : index
    %c0_75 = arith.constant 0 : index
    %c0_76 = arith.constant 0 : index
    %113 = vector.load %arg4[%c0_74, %c0_75, %c0_76] : memref<2x360x64xbf16, #tpu.memory_space<vmem>>, vector<1x360x64xbf16>
    %114 = vector.shape_cast %113 : vector<1x360x64xbf16> to vector<360x64xbf16>
    %cst_77 = arith.constant dense<0.000000e+00> : vector<32x64xf32>
    %115 = tpu.matmul %112, %114, %cst_77 {dimension_numbers = #tpu.dot_dimension_numbers<[1], [0], [0], [1], [0, 0, 1, 1], [], []>} : vector<32x360xbf16>, vector<360x64xbf16>, vector<32x64xf32> -> vector<32x64xf32>
    %c1_78 = arith.constant 1 : index
    %c0_79 = arith.constant 0 : index
    %c0_80 = arith.constant 0 : index
    %116 = vector.load %arg4[%c1_78, %c0_79, %c0_80] : memref<2x360x64xbf16, #tpu.memory_space<vmem>>, vector<1x360x64xbf16>
    %117 = vector.shape_cast %116 : vector<1x360x64xbf16> to vector<360x64xbf16>
    %cst_81 = arith.constant dense<0.000000e+00> : vector<32x64xf32>
    %118 = tpu.matmul %112, %117, %cst_81 {dimension_numbers = #tpu.dot_dimension_numbers<[1], [0], [0], [1], [0, 0, 1, 1], [], []>} : vector<32x360xbf16>, vector<360x64xbf16>, vector<32x64xf32> -> vector<32x64xf32>
    %119 = arith.maximumf %115, %118 : vector<32x64xf32>
    %120 = vector.extract_strided_slice %85 {offsets = [8, 0], sizes = [8, 72], strides = [1, 1]} : vector<96x72xf32> to vector<8x72xf32>
    %121 = vector.extract_strided_slice %85 {offsets = [24, 0], sizes = [8, 72], strides = [1, 1]} : vector<96x72xf32> to vector<8x72xf32>
    %122 = vector.extract_strided_slice %85 {offsets = [40, 0], sizes = [8, 72], strides = [1, 1]} : vector<96x72xf32> to vector<8x72xf32>
    %123 = vector.extract_strided_slice %85 {offsets = [56, 0], sizes = [8, 72], strides = [1, 1]} : vector<96x72xf32> to vector<8x72xf32>
    %124 = tpu.concatenate %120, %121, %122, %123 in 0 : vector<8x72xf32>, vector<8x72xf32>, vector<8x72xf32>, vector<8x72xf32> -> vector<32x72xf32>
    %125 = vector.extract_strided_slice %85 {offsets = [16, 0], sizes = [8, 72], strides = [1, 1]} : vector<96x72xf32> to vector<8x72xf32>
    %126 = vector.extract_strided_slice %85 {offsets = [32, 0], sizes = [8, 72], strides = [1, 1]} : vector<96x72xf32> to vector<8x72xf32>
    %127 = vector.extract_strided_slice %85 {offsets = [48, 0], sizes = [8, 72], strides = [1, 1]} : vector<96x72xf32> to vector<8x72xf32>
    %128 = vector.extract_strided_slice %85 {offsets = [64, 0], sizes = [8, 72], strides = [1, 1]} : vector<96x72xf32> to vector<8x72xf32>
    %129 = tpu.concatenate %125, %126, %127, %128 in 0 : vector<8x72xf32>, vector<8x72xf32>, vector<8x72xf32>, vector<8x72xf32> -> vector<32x72xf32>
    %130 = vector.extract_strided_slice %85 {offsets = [24, 0], sizes = [8, 72], strides = [1, 1]} : vector<96x72xf32> to vector<8x72xf32>
    %131 = vector.extract_strided_slice %85 {offsets = [40, 0], sizes = [8, 72], strides = [1, 1]} : vector<96x72xf32> to vector<8x72xf32>
    %132 = vector.extract_strided_slice %85 {offsets = [56, 0], sizes = [8, 72], strides = [1, 1]} : vector<96x72xf32> to vector<8x72xf32>
    %133 = vector.extract_strided_slice %85 {offsets = [72, 0], sizes = [8, 72], strides = [1, 1]} : vector<96x72xf32> to vector<8x72xf32>
    %134 = tpu.concatenate %130, %131, %132, %133 in 0 : vector<8x72xf32>, vector<8x72xf32>, vector<8x72xf32>, vector<8x72xf32> -> vector<32x72xf32>
    %135 = vector.extract_strided_slice %85 {offsets = [32, 0], sizes = [8, 72], strides = [1, 1]} : vector<96x72xf32> to vector<8x72xf32>
    %136 = vector.extract_strided_slice %85 {offsets = [48, 0], sizes = [8, 72], strides = [1, 1]} : vector<96x72xf32> to vector<8x72xf32>
    %137 = vector.extract_strided_slice %85 {offsets = [64, 0], sizes = [8, 72], strides = [1, 1]} : vector<96x72xf32> to vector<8x72xf32>
    %138 = vector.extract_strided_slice %85 {offsets = [80, 0], sizes = [8, 72], strides = [1, 1]} : vector<96x72xf32> to vector<8x72xf32>
    %139 = tpu.concatenate %135, %136, %137, %138 in 0 : vector<8x72xf32>, vector<8x72xf32>, vector<8x72xf32>, vector<8x72xf32> -> vector<32x72xf32>
    %140 = vector.extract_strided_slice %85 {offsets = [40, 0], sizes = [8, 72], strides = [1, 1]} : vector<96x72xf32> to vector<8x72xf32>
    %141 = vector.extract_strided_slice %85 {offsets = [56, 0], sizes = [8, 72], strides = [1, 1]} : vector<96x72xf32> to vector<8x72xf32>
    %142 = vector.extract_strided_slice %85 {offsets = [72, 0], sizes = [8, 72], strides = [1, 1]} : vector<96x72xf32> to vector<8x72xf32>
    %143 = vector.extract_strided_slice %85 {offsets = [88, 0], sizes = [8, 72], strides = [1, 1]} : vector<96x72xf32> to vector<8x72xf32>
    %144 = tpu.concatenate %140, %141, %142, %143 in 0 : vector<8x72xf32>, vector<8x72xf32>, vector<8x72xf32>, vector<8x72xf32> -> vector<32x72xf32>
    %145 = tpu.concatenate %124, %129, %134, %139, %144 in 1 : vector<32x72xf32>, vector<32x72xf32>, vector<32x72xf32>, vector<32x72xf32>, vector<32x72xf32> -> vector<32x360xf32>
    %146 = arith.truncf %145 : vector<32x360xf32> to vector<32x360xbf16>
    %c0_82 = arith.constant 0 : index
    %c0_83 = arith.constant 0 : index
    %c0_84 = arith.constant 0 : index
    %147 = vector.load %arg4[%c0_82, %c0_83, %c0_84] : memref<2x360x64xbf16, #tpu.memory_space<vmem>>, vector<1x360x64xbf16>
    %148 = vector.shape_cast %147 : vector<1x360x64xbf16> to vector<360x64xbf16>
    %cst_85 = arith.constant dense<0.000000e+00> : vector<32x64xf32>
    %149 = tpu.matmul %146, %148, %cst_85 {dimension_numbers = #tpu.dot_dimension_numbers<[1], [0], [0], [1], [0, 0, 1, 1], [], []>} : vector<32x360xbf16>, vector<360x64xbf16>, vector<32x64xf32> -> vector<32x64xf32>
    %150 = arith.maximumf %119, %149 : vector<32x64xf32>
    %c1_86 = arith.constant 1 : index
    %c0_87 = arith.constant 0 : index
    %c0_88 = arith.constant 0 : index
    %151 = vector.load %arg4[%c1_86, %c0_87, %c0_88] : memref<2x360x64xbf16, #tpu.memory_space<vmem>>, vector<1x360x64xbf16>
    %152 = vector.shape_cast %151 : vector<1x360x64xbf16> to vector<360x64xbf16>
    %cst_89 = arith.constant dense<0.000000e+00> : vector<32x64xf32>
    %153 = tpu.matmul %146, %152, %cst_89 {dimension_numbers = #tpu.dot_dimension_numbers<[1], [0], [0], [1], [0, 0, 1, 1], [], []>} : vector<32x360xbf16>, vector<360x64xbf16>, vector<32x64xf32> -> vector<32x64xf32>
    %154 = arith.maximumf %150, %153 : vector<32x64xf32>
    %c0_90 = arith.constant 0 : index
    %c0_91 = arith.constant 0 : index
    %155 = vector.load %arg5[%c0_90, %c0_91] : memref<1x64xf32, #tpu.memory_space<vmem>>, vector<1x64xf32>
    %156 = vector.broadcast %155 : vector<1x64xf32> to vector<32x64xf32>
    %157 = arith.addf %154, %156 : vector<32x64xf32>
    %cst_92 = arith.constant 0.000000e+00 : f32
    %158 = vector.broadcast %cst_92 : f32 to vector<32x64xf32>
    %159 = arith.maximumf %157, %158 : vector<32x64xf32>
    %160 = vector.extract_strided_slice %159 {offsets = [0, 0], sizes = [8, 64], strides = [1, 1]} : vector<32x64xf32> to vector<8x64xf32>
    %161 = vector.extract_strided_slice %159 {offsets = [8, 0], sizes = [8, 64], strides = [1, 1]} : vector<32x64xf32> to vector<8x64xf32>
    %162 = vector.extract_strided_slice %159 {offsets = [16, 0], sizes = [8, 64], strides = [1, 1]} : vector<32x64xf32> to vector<8x64xf32>
    %163 = vector.extract_strided_slice %159 {offsets = [24, 0], sizes = [8, 64], strides = [1, 1]} : vector<32x64xf32> to vector<8x64xf32>
    %164 = tpu.concatenate %160, %161, %162, %163 in 1 : vector<8x64xf32>, vector<8x64xf32>, vector<8x64xf32>, vector<8x64xf32> -> vector<8x256xf32>
    %165 = arith.truncf %164 : vector<8x256xf32> to vector<8x256xbf16>
    %c0_93 = arith.constant 0 : index
    %c0_94 = arith.constant 0 : index
    %166 = vector.load %arg6[%c0_93, %c0_94] : memref<256x128xbf16, #tpu.memory_space<vmem>>, vector<256x128xbf16>
    %cst_95 = arith.constant dense<0.000000e+00> : vector<8x128xf32>
    %167 = tpu.matmul %165, %166, %cst_95 {dimension_numbers = #tpu.dot_dimension_numbers<[1], [0], [0], [1], [0, 0, 1, 1], [], []>} : vector<8x256xbf16>, vector<256x128xbf16>, vector<8x128xf32> -> vector<8x128xf32>
    %c0_96 = arith.constant 0 : index
    %c0_97 = arith.constant 0 : index
    %168 = vector.load %arg7[%c0_96, %c0_97] : memref<1x128xf32, #tpu.memory_space<vmem>>, vector<1x128xf32>
    %169 = vector.broadcast %168 : vector<1x128xf32> to vector<8x128xf32>
    %170 = arith.addf %167, %169 : vector<8x128xf32>
    %cst_98 = arith.constant 0.000000e+00 : f32
    %171 = vector.broadcast %cst_98 : f32 to vector<8x128xf32>
    %172 = arith.maximumf %170, %171 : vector<8x128xf32>
    %173 = arith.truncf %172 : vector<8x128xf32> to vector<8x128xbf16>
    %c0_99 = arith.constant 0 : index
    %c0_100 = arith.constant 0 : index
    %174 = vector.load %arg8[%c0_99, %c0_100] : memref<128x128xbf16, #tpu.memory_space<vmem>>, vector<128x128xbf16>
    %cst_101 = arith.constant dense<0.000000e+00> : vector<8x128xf32>
    %175 = tpu.matmul %173, %174, %cst_101 {dimension_numbers = #tpu.dot_dimension_numbers<[1], [0], [0], [1], [0, 0, 1, 1], [], []>} : vector<8x128xbf16>, vector<128x128xbf16>, vector<8x128xf32> -> vector<8x128xf32>
    %c0_102 = arith.constant 0 : index
    %c0_103 = arith.constant 0 : index
    %176 = vector.load %arg9[%c0_102, %c0_103] : memref<1x128xf32, #tpu.memory_space<vmem>>, vector<1x128xf32>
    %177 = vector.broadcast %176 : vector<1x128xf32> to vector<8x128xf32>
    %178 = arith.addf %175, %177 : vector<8x128xf32>
    %cst_104 = arith.constant 0.000000e+00 : f32
    %179 = vector.broadcast %cst_104 : f32 to vector<8x128xf32>
    %180 = arith.maximumf %178, %179 : vector<8x128xf32>
    %181 = arith.truncf %180 : vector<8x128xf32> to vector<8x128xbf16>
    %c0_105 = arith.constant 0 : index
    %c0_106 = arith.constant 0 : index
    %182 = vector.load %arg10[%c0_105, %c0_106] : memref<128x128xbf16, #tpu.memory_space<vmem>>, vector<128x128xbf16>
    %cst_107 = arith.constant dense<0.000000e+00> : vector<8x128xf32>
    %183 = tpu.matmul %181, %182, %cst_107 {dimension_numbers = #tpu.dot_dimension_numbers<[1], [0], [0], [1], [0, 0, 1, 1], [], []>} : vector<8x128xbf16>, vector<128x128xbf16>, vector<8x128xf32> -> vector<8x128xf32>
    %c0_108 = arith.constant 0 : index
    %c0_109 = arith.constant 0 : index
    %184 = vector.load %arg11[%c0_108, %c0_109] : memref<1x128xf32, #tpu.memory_space<vmem>>, vector<1x128xf32>
    %185 = vector.broadcast %184 : vector<1x128xf32> to vector<8x128xf32>
    %186 = arith.addf %183, %185 : vector<8x128xf32>
    %c0_110 = arith.constant 0 : index
    %c0_111 = arith.constant 0 : index
    %187 = vector.load %arg12[%c0_110, %c0_111] : memref<8x128xf32, #tpu.memory_space<vmem>>, vector<8x128xf32>
    tpu.vector_store %arg12[%c0_110, %c0_111], %186 {strides = array<i32>} : memref<8x128xf32, #tpu.memory_space<vmem>>, vector<8x128xf32>,
    return
  }
  func.func @transform_0(%arg0: i32) -> (i32, i32, i32) {
    %c0_i32 = arith.constant 0 : i32
    %c0_i32_0 = arith.constant 0 : i32
    %c0_i32_1 = arith.constant 0 : i32
    return %c0_i32, %arg0, %c0_i32_0 : i32, i32, i32
  }
  func.func @transform_1(%arg0: i32) -> (i32, i32, i32) {
    %c0_i32 = arith.constant 0 : i32
    %c0_i32_0 = arith.constant 0 : i32
    %c0_i32_1 = arith.constant 0 : i32
    %c0_i32_2 = arith.constant 0 : i32
    return %c0_i32, %c0_i32_0, %c0_i32_1 : i32, i32, i32
  }
  func.func @transform_2(%arg0: i32) -> (i32, i32) {
    %c0_i32 = arith.constant 0 : i32
    %c0_i32_0 = arith.constant 0 : i32
    %c0_i32_1 = arith.constant 0 : i32
    return %c0_i32, %c0_i32_0 : i32, i32
  }
  func.func @transform_3(%arg0: i32) -> (i32, i32, i32) {
    %c0_i32 = arith.constant 0 : i32
    %c0_i32_0 = arith.constant 0 : i32
    %c0_i32_1 = arith.constant 0 : i32
    %c0_i32_2 = arith.constant 0 : i32
    return %c0_i32, %c0_i32_0, %c0_i32_1 : i32, i32, i32
  }
  func.func @transform_4(%arg0: i32) -> (i32, i32) {
    %c0_i32 = arith.constant 0 : i32
    %c0_i32_0 = arith.constant 0 : i32
    %c0_i32_1 = arith.constant 0 : i32
    return %c0_i32, %c0_i32_0 : i32, i32
  }
  func.func @transform_5(%arg0: i32) -> (i32, i32) {
    %c0_i32 = arith.constant 0 : i32
    %c0_i32_0 = arith.constant 0 : i32
    %c0_i32_1 = arith.constant 0 : i32
    return %c0_i32, %c0_i32_0 : i32, i32
  }
  func.func @transform_6(%arg0: i32) -> (i32, i32) {
    %c0_i32 = arith.constant 0 : i32
    %c0_i32_0 = arith.constant 0 : i32
    %c0_i32_1 = arith.constant 0 : i32
    return %c0_i32, %c0_i32_0 : i32, i32
  }
  func.func @transform_7(%arg0: i32) -> (i32, i32) {
    %c0_i32 = arith.constant 0 : i32
    %c0_i32_0 = arith.constant 0 : i32
    %c0_i32_1 = arith.constant 0 : i32
    return %c0_i32, %c0_i32_0 : i32, i32
  }
  func.func @transform_8(%arg0: i32) -> (i32, i32) {
    %c0_i32 = arith.constant 0 : i32
    %c0_i32_0 = arith.constant 0 : i32
    %c0_i32_1 = arith.constant 0 : i32
    return %c0_i32, %c0_i32_0 : i32, i32
  }
  func.func @transform_9(%arg0: i32) -> (i32, i32) {
    %c0_i32 = arith.constant 0 : i32
    %c0_i32_0 = arith.constant 0 : i32
    %c0_i32_1 = arith.constant 0 : i32
    return %c0_i32, %c0_i32_0 : i32, i32
  }
  func.func @transform_10(%arg0: i32) -> (i32, i32) {
    %c0_i32 = arith.constant 0 : i32
    %c0_i32_0 = arith.constant 0 : i32
    %c0_i32_1 = arith.constant 0 : i32
    return %c0_i32, %c0_i32_0 : i32, i32
  }
  func.func @transform_11(%arg0: i32) -> (i32, i32) {
    %c0_i32 = arith.constant 0 : i32
    %c0_i32_0 = arith.constant 0 : i32
    return %arg0, %c0_i32 : i32, i32
  }
}

</mosaic_0001>

<llo_original>
// kernel: tile.13
$region0: #{tile.13}
  #allocation0 [shape = 's32[1]{0}', space=sflag, size = 0x4, scoped, tag = 'scoped memory for tile.13']
  %s0 = inlined_call_operand.vmem [shape: f32[6], index: 0, kind: input, shape index: {}]
  %s1 = inlined_call_operand.vmem [shape: f32[12,6], index: 1, kind: output, shape index: {}]
  // Predicated region
  $region2: #{tile.13} parent=0 // pred_check
    _
  $region3: #{tile.13} parent=0 // pred_check_branch
    %3 = sbr.rel (0) target = $region5
  $region4: #{tile.13} parent=0 // pred_region
    _
  $region5: #{tile.13} parent=0 // pred_fallthru
    _
  %v4 = vld [vmem:[%s0] ss:$0 sm:$0xff]
  %5 = vst [vmem:[%s1] sm:$0xff] %v4
  %s6 = scalar_lea.vmem %s1, 8
  %7 = vst [vmem:[%s6] sm:$0xff] %v4

// kernel: tile.14
$region0: #{tile.14}
  %s0 = inlined_call_operand.vmem [shape: f32[12,6], index: 0, kind: input, shape index: {}]
  %s1 = inlined_call_operand.vmem [shape: f32[1,72], index: 1, kind: output, shape index: {}]
  $region1: #{tile.14} parent=0
    #allocation0 [shape = 'u8[4096]{0}', space=vmem, size = 0x1000, scoped, tag = 'scoped mem for output reshape']
    %v2 = vld [vmem:[%s0] sm:$0x1]
    %vm3 = vcmask 48128
    %4 = vst.msk [vmem:[#allocation0] sm:$0x1] %vm3, %v2
    %s5 = scalar_lea.vmem %s0, 11
    %v6 = vld [vmem:[%s5] sm:$0x1]
    %7 = vrot.lane.b32.xlu0 %v6, 66
    %v8 = vpop.permute.xlu0 %7
    %vm9 = vcmask 589328
    %10 = vst.msk [vmem:[#allocation0] sm:$0x1] %vm9, %v8
    %s11 = scalar_lea.vmem %s0, 10
    %v12 = vld [vmem:[%s11] sm:$0x1]
    %13 = vrot.lane.b32.xlu0 %v12, 60
    %v14 = vpop.permute.xlu0 %13
    %vm15 = vcmask 540128
    %16 = vst.msk [vmem:[#allocation0] sm:$0x1] %vm15, %v14
    %s17 = scalar_lea.vmem %s0, 9
    %v18 = vld [vmem:[%s17] sm:$0x1]
    %19 = vrot.lane.b32.xlu0 %v18, 54
    %v20 = vpop.permute.xlu0 %19
    %vm21 = vcmask 490928
    %22 = vst.msk [vmem:[#allocation0] sm:$0x1] %vm21, %v20
    %s23 = scalar_lea.vmem %s0, 8
    %v24 = vld [vmem:[%s23] sm:$0x1]
    %25 = vrot.lane.b32.xlu0 %v24, 48
    %v26 = vpop.permute.xlu0 %25
    %vm27 = vcmask 441728
    %28 = vst.msk [vmem:[#allocation0] sm:$0x1] %vm27, %v26
    %s29 = scalar_lea.vmem %s0, 7
    %v30 = vld [vmem:[%s29] sm:$0x1]
    %31 = vrot.lane.b32.xlu0 %v30, 42
    %v32 = vpop.permute.xlu0 %31
    %vm33 = vcmask 392528
    %34 = vst.msk [vmem:[#allocation0] sm:$0x1] %vm33, %v32
    %s35 = scalar_lea.vmem %s0, 6
    %v36 = vld [vmem:[%s35] sm:$0x1]
    %37 = vrot.lane.b32.xlu0 %v36, 36
    %v38 = vpop.permute.xlu0 %37
    %vm39 = vcmask 343328
    %40 = vst.msk [vmem:[#allocation0] sm:$0x1] %vm39, %v38
    %s41 = scalar_lea.vmem %s0, 5
    %v42 = vld [vmem:[%s41] sm:$0x1]
    %43 = vrot.lane.b32.xlu0 %v42, 30
    %v44 = vpop.permute.xlu0 %43
    %vm45 = vcmask 294128
    %46 = vst.msk [vmem:[#allocation0] sm:$0x1] %vm45, %v44
    %s47 = scalar_lea.vmem %s0, 4
    %v48 = vld [vmem:[%s47] sm:$0x1]
    %49 = vrot.lane.b32.xlu0 %v48, 24
    %v50 = vpop.permute.xlu0 %49
    %vm51 = vcmask 244928
    %52 = vst.msk [vmem:[#allocation0] sm:$0x1] %vm51, %v50
    %s53 = scalar_lea.vmem %s0, 3
    %v54 = vld [vmem:[%s53] sm:$0x1]
    %55 = vrot.lane.b32.xlu0 %v54, 18
    %v56 = vpop.permute.xlu0 %55
    %vm57 = vcmask 195728
    %58 = vst.msk [vmem:[#allocation0] sm:$0x1] %vm57, %v56
    %s59 = scalar_lea.vmem %s0, 2
    %v60 = vld [vmem:[%s59] sm:$0x1]
    %61 = vrot.lane.b32.xlu0 %v60, 12
    %v62 = vpop.permute.xlu0 %61
    %vm63 = vcmask 146528
    %64 = vst.msk [vmem:[#allocation0] sm:$0x1] %vm63, %v62
    %s65 = scalar_lea.vmem %s0, 1
    %v66 = vld [vmem:[%s65] sm:$0x1]
    %67 = vrot.lane.b32.xlu0 %v66, 6
    %v68 = vpop.permute.xlu0 %67
    %vm69 = vcmask 97328
    %70 = vst.msk [vmem:[#allocation0] sm:$0x1] %vm69, %v68
    %s72 = sshllo.u32 0, 1
    %v74 = vld [vmem:[#allocation0] sm:%s72]
    %s75 = sshllo.u32 0, 1
    %76 = vst [vmem:[%s1] sm:%s75] %v74

// kernel: tile.18
$region0: #{tile.18}
  #allocation0 [shape = 's32[1]{0}', space=sflag, size = 0x4, scoped, tag = 'scoped memory for tile.18']
  %s0 = inlined_call_operand.vmem [shape: f32[16], index: 0, kind: input, shape index: {}]
  %s1 = inlined_call_operand.vmem [shape: f32[4,16], index: 1, kind: output, shape index: {}]
  // Predicated region
  $region2: #{tile.18} parent=0 // pred_check
    _
  $region3: #{tile.18} parent=0 // pred_check_branch
    %3 = sbr.rel (0) target = $region5
  $region4: #{tile.18} parent=0 // pred_region
    _
  $region5: #{tile.18} parent=0 // pred_fallthru
    _
  %v4 = vld [vmem:[%s0] ss:$0 sm:$0xff]
  %5 = vst [vmem:[%s1] sm:$0xf] %v4

// kernel: tile.19
$region0: #{tile.19}
  %s0 = inlined_call_operand.vmem [shape: f32[4,16], index: 0, kind: input, shape index: {}]
  %s1 = inlined_call_operand.vmem [shape: f32[1,64], index: 1, kind: output, shape index: {}]
  $region1: #{tile.19} parent=0
    #allocation0 [shape = 'u8[4096]{0}', space=vmem, size = 0x1000, scoped, tag = 'scoped mem for output reshape']
    #allocation1 [shape = 'u8[4096]{0}', space=vmem, size = 0x1000, scoped, tag = 'scoped mem for input reshape']
    %s3 = sshllo.u32 0, 4
    %v4 = vld [vmem:[%s0] sm:%s3]
    %5 = vst [vmem:[#allocation1] sm:%s3] %v4
    %v6 = vld [vmem:[#allocation1] sm:$0x1]
    %vm7 = vcmask 130048
    %8 = vst.msk [vmem:[#allocation0] sm:$0x1] %vm7, %v6
    %s9 = scalar_lea.vmem [#allocation1], 3
    %v10 = vld [vmem:[%s9] sm:$0x1]
    %11 = vrot.lane.b32.xlu0 %v10, 48
    %v12 = vpop.permute.xlu0 %11
    %vm13 = vcmask 523648
    %14 = vst.msk [vmem:[#allocation0] sm:$0x1] %vm13, %v12
    %s15 = scalar_lea.vmem [#allocation1], 2
    %v16 = vld [vmem:[%s15] sm:$0x1]
    %17 = vrot.lane.b32.xlu0 %v16, 32
    %v18 = vpop.permute.xlu0 %17
    %vm19 = vcmask 392448
    %20 = vst.msk [vmem:[#allocation0] sm:$0x1] %vm19, %v18
    %s21 = scalar_lea.vmem [#allocation1], 1
    %v22 = vld [vmem:[%s21] sm:$0x1]
    %23 = vrot.lane.b32.xlu0 %v22, 16
    %v24 = vpop.permute.xlu0 %23
    %vm25 = vcmask 261248
    %26 = vst.msk [vmem:[#allocation0] sm:$0x1] %vm25, %v24
    %s28 = sshllo.u32 0, 1
    %v30 = vld [vmem:[#allocation0] sm:%s28]
    %s31 = sshllo.u32 0, 1
    %32 = vst [vmem:[%s1] sm:%s31] %v30

// kernel: net_forward.1
$region0: #{net_forward.1}
  #allocation0 [shape = 'u32[]', space=smem, size = 0x4, offset = 0x4, fixed_abs, tag = 'smem constant byte address 0x4 - core index']
  #allocation1 [shape = 'u32[144,128]{1,0:T(1,128)}', space=vmem, size = 0x12000, scoped, tag = 'internal scratch']
  %s0 = inlined_call_operand.vmem [shape: f32[28,8,28], index: 0, kind: input, shape index: {}]
  %s1 = inlined_call_operand.vmem [shape: bf16[2,140,72], index: 1, kind: input, shape index: {}]
  %s2 = inlined_call_operand.vmem [shape: f32[1,72], index: 2, kind: input, shape index: {}]
  %s3 = inlined_call_operand.vmem [shape: bf16[2,360,64], index: 3, kind: input, shape index: {}]
  %s4 = inlined_call_operand.vmem [shape: f32[1,64], index: 4, kind: input, shape index: {}]
  %s5 = inlined_call_operand.vmem [shape: bf16[256,128], index: 5, kind: input, shape index: {}]
  %s6 = inlined_call_operand.vmem [shape: f32[1,128], index: 6, kind: input, shape index: {}]
  %s7 = inlined_call_operand.vmem [shape: bf16[128,128], index: 7, kind: input, shape index: {}]
  %s8 = inlined_call_operand.vmem [shape: f32[1,128], index: 8, kind: input, shape index: {}]
  %s9 = inlined_call_operand.vmem [shape: bf16[128,128], index: 9, kind: input, shape index: {}]
  %s10 = inlined_call_operand.vmem [shape: f32[1,128], index: 10, kind: input, shape index: {}]
  %s11 = inlined_call_operand.vmem [shape: f32[8,128], index: 11, kind: output, shape index: {}]
  %s12 = sld [smem:[#allocation0]]
  $region54: #{net_forward.1} parent=0
    _
  %s14 = ssub.s32 1, %s12
  %s15 = scalar_select 0, %s14, %s12
  // Predicated region
  $region2: #{net_forward.1} parent=0 // pred_check
    _
  $region3: #{net_forward.1} parent=0 // pred_check_branch
    %17 = sbr.rel (0) target = $region5
  $region4: #{net_forward.1} parent=0 // pred_region
    _
  $region5: #{net_forward.1} parent=0 // pred_fallthru
    _
  // Predicated region
  $region6: #{net_forward.1} parent=0 // pred_check
    _
  $region7: #{net_forward.1} parent=0 // pred_check_branch
    %19 = sbr.rel (0) target = $region9
  $region8: #{net_forward.1} parent=0 // pred_region
    _
  $region9: #{net_forward.1} parent=0 // pred_fallthru
    _
  // Predicated region
  $region10: #{net_forward.1} parent=0 // pred_check
    _
  $region11: #{net_forward.1} parent=0 // pred_check_branch
    %21 = sbr.rel (0) target = $region13
  $region12: #{net_forward.1} parent=0 // pred_region
    _
  $region13: #{net_forward.1} parent=0 // pred_fallthru
    _
  // Predicated region
  $region14: #{net_forward.1} parent=0 // pred_check
    _
  $region15: #{net_forward.1} parent=0 // pred_check_branch
    %23 = sbr.rel (0) target = $region17
  $region16: #{net_forward.1} parent=0 // pred_region
    _
  $region17: #{net_forward.1} parent=0 // pred_fallthru
    _
  // Predicated region
  $region18: #{net_forward.1} parent=0 // pred_check
    _
  $region19: #{net_forward.1} parent=0 // pred_check_branch
    %25 = sbr.rel (0) target = $region21
  $region20: #{net_forward.1} parent=0 // pred_region
    _
  $region21: #{net_forward.1} parent=0 // pred_fallthru
    _
  // Predicated region
  $region22: #{net_forward.1} parent=0 // pred_check
    _
  $region23: #{net_forward.1} parent=0 // pred_check_branch
    %27 = sbr.rel (0) target = $region25
  $region24: #{net_forward.1} parent=0 // pred_region
    _
  $region25: #{net_forward.1} parent=0 // pred_fallthru
    _
  // Predicated region
  $region26: #{net_forward.1} parent=0 // pred_check
    _
  $region27: #{net_forward.1} parent=0 // pred_check_branch
    %29 = sbr.rel (0) target = $region29
  $region28: #{net_forward.1} parent=0 // pred_region
    _
  $region29: #{net_forward.1} parent=0 // pred_fallthru
    _
  // Predicated region
  $region30: #{net_forward.1} parent=0 // pred_check
    _
  $region31: #{net_forward.1} parent=0 // pred_check_branch
    %31 = sbr.rel (0) target = $region33
  $region32: #{net_forward.1} parent=0 // pred_region
    _
  $region33: #{net_forward.1} parent=0 // pred_fallthru
    _
  // Predicated region
  $region34: #{net_forward.1} parent=0 // pred_check
    _
  $region35: #{net_forward.1} parent=0 // pred_check_branch
    %33 = sbr.rel (0) target = $region37
  $region36: #{net_forward.1} parent=0 // pred_region
    _
  $region37: #{net_forward.1} parent=0 // pred_fallthru
    _
  // Predicated region
  $region38: #{net_forward.1} parent=0 // pred_check
    _
  $region39: #{net_forward.1} parent=0 // pred_check_branch
    %35 = sbr.rel (0) target = $region41
  $region40: #{net_forward.1} parent=0 // pred_region
    _
  $region41: #{net_forward.1} parent=0 // pred_fallthru
    _
  // Predicated region
  $region42: #{net_forward.1} parent=0 // pred_check
    _
  $region43: #{net_forward.1} parent=0 // pred_check_branch
    %37 = sbr.rel (0) target = $region45
  $region44: #{net_forward.1} parent=0 // pred_region
    _
  $region45: #{net_forward.1} parent=0 // pred_fallthru
    _
  %v39 = vld [vmem:[%s0] sm:$0xff]
  %s40 = scalar_lea.vmem %s0, 8
  %v41 = vld [vmem:[%s40] sm:$0xff]
  %s42 = scalar_lea.vmem %s0, 16
  %v43 = vld [vmem:[%s42] sm:$0xff]
  %s44 = scalar_lea.vmem %s0, 24
  %v45 = vld [vmem:[%s44] sm:$0xff]
  %s46 = scalar_lea.vmem %s0, 32
  %v47 = vld [vmem:[%s46] sm:$0xff]
  %s48 = scalar_lea.vmem %s0, 40
  %v49 = vld [vmem:[%s48] sm:$0xff]
  %s50 = scalar_lea.vmem %s0, 48
  %v51 = vld [vmem:[%s50] sm:$0xff]
  %s52 = scalar_lea.vmem %s0, 56
  %v53 = vld [vmem:[%s52] sm:$0xff]
  %s54 = scalar_lea.vmem %s0, 64
  %v55 = vld [vmem:[%s54] sm:$0xff]
  %s56 = scalar_lea.vmem %s0, 72
  %v57 = vld [vmem:[%s56] sm:$0xff]
  %s58 = scalar_lea.vmem %s0, 80
  %v59 = vld [vmem:[%s58] sm:$0xff]
  %s60 = scalar_lea.vmem %s0, 88
  %v61 = vld [vmem:[%s60] sm:$0xff]
  %s62 = scalar_lea.vmem %s0, 96
  %v63 = vld [vmem:[%s62] sm:$0xff]
  %s64 = scalar_lea.vmem %s0, 104
  %v65 = vld [vmem:[%s64] sm:$0xff]
  %s66 = scalar_lea.vmem %s0, 112
  %v67 = vld [vmem:[%s66] sm:$0xff]
  %s68 = scalar_lea.vmem %s0, 120
  %v69 = vld [vmem:[%s68] sm:$0xff]
  %s70 = scalar_lea.vmem %s0, 128
  %v71 = vld [vmem:[%s70] sm:$0xff]
  %s72 = scalar_lea.vmem %s0, 136
  %v73 = vld [vmem:[%s72] sm:$0xff]
  %s74 = scalar_lea.vmem %s0, 144
  %v75 = vld [vmem:[%s74] sm:$0xff]
  %s76 = scalar_lea.vmem %s0, 152
  %v77 = vld [vmem:[%s76] sm:$0xff]
  %s78 = scalar_lea.vmem %s0, 160
  %v79 = vld [vmem:[%s78] sm:$0xff]
  %s80 = scalar_lea.vmem %s0, 168
  %v81 = vld [vmem:[%s80] sm:$0xff]
  %s82 = scalar_lea.vmem %s0, 176
  %v83 = vld [vmem:[%s82] sm:$0xff]
  %s84 = scalar_lea.vmem %s0, 184
  %v85 = vld [vmem:[%s84] sm:$0xff]
  %s86 = scalar_lea.vmem %s0, 192
  %v87 = vld [vmem:[%s86] sm:$0xff]
  %s88 = scalar_lea.vmem %s0, 200
  %v89 = vld [vmem:[%s88] sm:$0xff]
  %s90 = scalar_lea.vmem %s0, 208
  %v91 = vld [vmem:[%s90] sm:$0xff]
  %s92 = scalar_lea.vmem %s0, 216
  %v93 = vld [vmem:[%s92] sm:$0xff]
  %106 = vrot.lane.b32.xlu0 %v41, 28
  %v107 = vpop.permute.xlu0 %106
  %108 = vrot.lane.b32.xlu0 %v45, 28
  %v109 = vpop.permute.xlu0 %108
  %110 = vrot.lane.b32.xlu0 %v49, 28
  %v111 = vpop.permute.xlu0 %110
  %112 = vrot.lane.b32.xlu0 %v53, 28
  %v113 = vpop.permute.xlu0 %112
  %114 = vrot.lane.b32.xlu0 %v57, 28
  %v115 = vpop.permute.xlu0 %114
  %116 = vrot.lane.b32.xlu0 %v61, 28
  %v117 = vpop.permute.xlu0 %116
  %118 = vrot.lane.b32.xlu0 %v65, 28
  %v119 = vpop.permute.xlu0 %118
  %120 = vrot.lane.b32.xlu0 %v69, 28
  %v121 = vpop.permute.xlu0 %120
  %122 = vrot.lane.b32.xlu0 %v73, 28
  %v123 = vpop.permute.xlu0 %122
  %124 = vrot.lane.b32.xlu0 %v77, 28
  %v125 = vpop.permute.xlu0 %124
  %126 = vrot.lane.b32.xlu0 %v81, 28
  %v127 = vpop.permute.xlu0 %126
  %128 = vrot.lane.b32.xlu0 %v85, 28
  %v129 = vpop.permute.xlu0 %128
  %154 = vrot.lane.b32.xlu0 %v43, 56
  %v155 = vpop.permute.xlu0 %154
  %156 = vrot.lane.b32.xlu0 %v47, 56
  %v157 = vpop.permute.xlu0 %156
  %158 = vrot.lane.b32.xlu0 %v51, 56
  %v159 = vpop.permute.xlu0 %158
  %160 = vrot.lane.b32.xlu0 %v55, 56
  %v161 = vpop.permute.xlu0 %160
  %162 = vrot.lane.b32.xlu0 %v59, 56
  %v163 = vpop.permute.xlu0 %162
  %164 = vrot.lane.b32.xlu0 %v63, 56
  %v165 = vpop.permute.xlu0 %164
  %166 = vrot.lane.b32.xlu0 %v67, 56
  %v167 = vpop.permute.xlu0 %166
  %168 = vrot.lane.b32.xlu0 %v71, 56
  %v169 = vpop.permute.xlu0 %168
  %170 = vrot.lane.b32.xlu0 %v75, 56
  %v171 = vpop.permute.xlu0 %170
  %172 = vrot.lane.b32.xlu0 %v79, 56
  %v173 = vpop.permute.xlu0 %172
  %174 = vrot.lane.b32.xlu0 %v83, 56
  %v175 = vpop.permute.xlu0 %174
  %176 = vrot.lane.b32.xlu0 %v87, 56
  %v177 = vpop.permute.xlu0 %176
  %191 = vrot.lane.b32.xlu0 %v45, 84
  %v192 = vpop.permute.xlu0 %191
  %193 = vrot.lane.b32.xlu0 %v49, 84
  %v194 = vpop.permute.xlu0 %193
  %195 = vrot.lane.b32.xlu0 %v53, 84
  %v196 = vpop.permute.xlu0 %195
  %197 = vrot.lane.b32.xlu0 %v57, 84
  %v198 = vpop.permute.xlu0 %197
  %199 = vrot.lane.b32.xlu0 %v61, 84
  %v200 = vpop.permute.xlu0 %199
  %201 = vrot.lane.b32.xlu0 %v65, 84
  %v202 = vpop.permute.xlu0 %201
  %203 = vrot.lane.b32.xlu0 %v69, 84
  %v204 = vpop.permute.xlu0 %203
  %205 = vrot.lane.b32.xlu0 %v73, 84
  %v206 = vpop.permute.xlu0 %205
  %207 = vrot.lane.b32.xlu0 %v77, 84
  %v208 = vpop.permute.xlu0 %207
  %209 = vrot.lane.b32.xlu0 %v81, 84
  %v210 = vpop.permute.xlu0 %209
  %211 = vrot.lane.b32.xlu0 %v85, 84
  %v212 = vpop.permute.xlu0 %211
  %213 = vrot.lane.b32.xlu0 %v89, 84
  %v214 = vpop.permute.xlu0 %213
  %228 = vrot.lane.b32.xlu0 %v47, 112
  %v229 = vpop.permute.xlu0 %228
  %230 = vrot.lane.b32.xlu0 %v51, 112
  %v231 = vpop.permute.xlu0 %230
  %232 = vrot.lane.b32.xlu0 %v55, 112
  %v233 = vpop.permute.xlu0 %232
  %234 = vrot.lane.b32.xlu0 %v59, 112
  %v235 = vpop.permute.xlu0 %234
  %236 = vrot.lane.b32.xlu0 %v63, 112
  %v237 = vpop.permute.xlu0 %236
  %238 = vrot.lane.b32.xlu0 %v67, 112
  %v239 = vpop.permute.xlu0 %238
  %240 = vrot.lane.b32.xlu0 %v71, 112
  %v241 = vpop.permute.xlu0 %240
  %242 = vrot.lane.b32.xlu0 %v75, 112
  %v243 = vpop.permute.xlu0 %242
  %244 = vrot.lane.b32.xlu0 %v79, 112
  %v245 = vpop.permute.xlu0 %244
  %246 = vrot.lane.b32.xlu0 %v83, 112
  %v247 = vpop.permute.xlu0 %246
  %248 = vrot.lane.b32.xlu0 %v87, 112
  %v249 = vpop.permute.xlu0 %248
  %250 = vrot.lane.b32.xlu0 %v91, 112
  %v251 = vpop.permute.xlu0 %250
  %vm264 = vcmask 228352
  %v265 = vsel %vm264, %v39, %v107
  %v266 = vsel %vm264, %v43, %v109
  %v267 = vsel %vm264, %v47, %v111
  %v268 = vsel %vm264, %v51, %v113
  %v269 = vsel %vm264, %v55, %v115
  %v270 = vsel %vm264, %v59, %v117
  %v271 = vsel %vm264, %v63, %v119
  %v272 = vsel %vm264, %v67, %v121
  %v273 = vsel %vm264, %v71, %v123
  %v274 = vsel %vm264, %v75, %v125
  %v275 = vsel %vm264, %v79, %v127
  %v276 = vsel %vm264, %v83, %v129
  %vm277 = vcmask 457728
  %v278 = vsel %vm277, %v265, %v155
  %v279 = vsel %vm277, %v266, %v157
  %v280 = vsel %vm277, %v267, %v159
  %v281 = vsel %vm277, %v268, %v161
  %v282 = vsel %vm277, %v269, %v163
  %v283 = vsel %vm277, %v270, %v165
  %v284 = vsel %vm277, %v271, %v167
  %v285 = vsel %vm277, %v272, %v169
  %v286 = vsel %vm277, %v273, %v171
  %v287 = vsel %vm277, %v274, %v173
  %v288 = vsel %vm277, %v275, %v175
  %v289 = vsel %vm277, %v276, %v177
  %vm290 = vcmask 687104
  %v291 = vsel %vm290, %v278, %v192
  %v292 = vsel %vm290, %v279, %v194
  %v293 = vsel %vm290, %v280, %v196
  %v294 = vsel %vm290, %v281, %v198
  %v295 = vsel %vm290, %v282, %v200
  %v296 = vsel %vm290, %v283, %v202
  %v297 = vsel %vm290, %v284, %v204
  %v298 = vsel %vm290, %v285, %v206
  %v299 = vsel %vm290, %v286, %v208
  %v300 = vsel %vm290, %v287, %v210
  %v301 = vsel %vm290, %v288, %v212
  %v302 = vsel %vm290, %v289, %v214
  %vm303 = vcmask 916480
  %v304 = vsel %vm303, %v291, %v229
  %v305 = vsel %vm303, %v292, %v231
  %v306 = vsel %vm303, %v293, %v233
  %v307 = vsel %vm303, %v294, %v235
  %v308 = vsel %vm303, %v295, %v237
  %v309 = vsel %vm303, %v296, %v239
  %v310 = vsel %vm303, %v297, %v241
  %v311 = vsel %vm303, %v298, %v243
  %v312 = vsel %vm303, %v299, %v245
  %v313 = vsel %vm303, %v300, %v247
  %v314 = vsel %vm303, %v301, %v249
  %v315 = vsel %vm303, %v302, %v251
  %v316 = vpack.c.bf16 %v305, %v304
  %v317 = vpack.c.bf16 %v231, %v229
  %v318 = vpack.c.bf16 %v307, %v306
  %v319 = vpack.c.bf16 %v235, %v233
  %v320 = vpack.c.bf16 %v309, %v308
  %v321 = vpack.c.bf16 %v239, %v237
  %v322 = vpack.c.bf16 %v311, %v310
  %v323 = vpack.c.bf16 %v243, %v241
  %v324 = vpack.c.bf16 %v313, %v312
  %v325 = vpack.c.bf16 %v247, %v245
  %v326 = vpack.c.bf16 %v315, %v314
  %v327 = vpack.c.bf16 %v251, %v249
  %v328 = vld [vmem:[%s1] sm:$0xf]
  %v329 = vld [vmem:[%s1 + $0x4] sm:$0xf]
  %v330 = vld [vmem:[%s1 + $0x8] sm:$0xf]
  %v331 = vld [vmem:[%s1 + $0xc] sm:$0xf]
  %v332 = vld [vmem:[%s1 + $0x10] sm:$0xf]
  %v333 = vld [vmem:[%s1 + $0x14] sm:$0xf]
  %v334 = vld [vmem:[%s1 + $0x18] sm:$0xf]
  %v335 = vld [vmem:[%s1 + $0x1c] sm:$0xf]
  %v336 = vld [vmem:[%s1 + $0x20] sm:$0xf]
  %v337 = vld [vmem:[%s1 + $0x24] sm:$0xf]
  %v338 = vld [vmem:[%s1 + $0x28] sm:$0xf]
  %v339 = vld [vmem:[%s1 + $0x2c] sm:$0xf]
  %v340 = vld [vmem:[%s1 + $0x30] sm:$0xf]
  %v341 = vld [vmem:[%s1 + $0x34] sm:$0xf]
  %v342 = vld [vmem:[%s1 + $0x38] sm:$0xf]
  %v343 = vld [vmem:[%s1 + $0x3c] sm:$0xf]
  %v344 = vld [vmem:[%s1 + $0x40] sm:$0xf]
  %v345 = vld [vmem:[%s1 + $0x44] sm:$0x3]
  %v364 = vunpack.c.l.b16 %v328
  %v365 = vunpack.c.l.b16 %v329
  %v366 = vunpack.c.l.b16 %v330
  %v367 = vunpack.c.l.b16 %v331
  %v368 = vunpack.c.l.b16 %v332
  %v369 = vunpack.c.l.b16 %v333
  %v370 = vunpack.c.l.b16 %v334
  %v371 = vunpack.c.l.b16 %v335
  %v372 = vunpack.c.l.b16 %v336
  %v373 = vunpack.c.l.b16 %v337
  %v374 = vunpack.c.l.b16 %v338
  %v375 = vunpack.c.l.b16 %v339
  %v376 = vunpack.c.l.b16 %v340
  %v377 = vunpack.c.l.b16 %v341
  %v378 = vunpack.c.l.b16 %v342
  %v379 = vunpack.c.l.b16 %v343
  %v380 = vunpack.c.l.b16 %v344
  %v381 = vunpack.c.l.b16 %v345
  %v382 = vpack.c.b16 %v365, %v364
  %v383 = vpack.c.b16 %v367, %v366
  %v384 = vpack.c.b16 %v369, %v368
  %v385 = vpack.c.b16 %v371, %v370
  %v386 = vpack.c.b16 %v373, %v372
  %v387 = vpack.c.b16 %v375, %v374
  %v388 = vpack.c.b16 %v377, %v376
  %v389 = vpack.c.b16 %v379, %v378
  %v390 = vpack.c.b16 %v381, %v380
  %vm399 = vcmask 97280
  %v401 = vsel %vm399, %v317, 0
  %v404 = vsel %vm399, %v319, 0
  %v407 = vsel %vm399, %v321, 0
  %v410 = vsel %vm399, %v323, 0
  %v413 = vsel %vm399, %v325, 0
  %v416 = vsel %vm399, %v327, 0
  %vm418 = vcmask 1045504
  %v420 = vsel %vm418, %v390, 0
  %422 = vmatprep.subr.bf16.mxu0 0
  %423 = vmatpush1.bf16.msra.mxu0 %v382
  %424 = vmatprep.subr.bf16.mxu0 0
  %425 = vmatpush1.bf16.msra.mxu0 %v383
  %426 = vmatprep.subr.bf16.mxu0 0
  %427 = vmatpush1.bf16.msra.mxu0 %v384
  %428 = vmatprep.subr.bf16.mxu0 0
  %429 = vmatpush1.bf16.msra.mxu0 %v385
  %430 = vmatprep.subr.bf16.mxu0 0
  %431 = vmatpush1.bf16.msra.mxu0 %v386
  %432 = vmatprep.subr.bf16.mxu0 0
  %433 = vmatpush1.bf16.msra.mxu0 %v387
  %434 = vmatprep.subr.bf16.mxu0 0
  %435 = vmatpush1.bf16.msra.mxu0 %v388
  %436 = vmatprep.subr.bf16.mxu0 0
  %437 = vmatpush1.bf16.msra.mxu0 %v389
  %438 = vmatprep.subr.bf16.mxu0 0
  %439 = vmatpush1.bf16.msra.mxu0 %v420
  %440 = vmatprep.subr.bf16.mxu0 0
  %441 = vmatpush1.bf16.msra.mxu0 0
  %442 = vmatprep.subr.bf16.mxu0 0
  %443 = vmatpush1.bf16.msra.mxu0 0
  %444 = vmatprep.subr.bf16.mxu0 0
  %445 = vmatpush1.bf16.msra.mxu0 0
  %446 = vmatprep.subr.bf16.mxu0 0
  %447 = vmatpush1.bf16.msra.mxu0 0
  %448 = vmatprep.subr.bf16.mxu0 0
  %449 = vmatpush1.bf16.msra.mxu0 0
  %450 = vmatprep.subr.bf16.mxu0 0
  %451 = vmatpush1.bf16.msra.mxu0 0
  %452 = vmatprep.subr.bf16.mxu0 0
  %453 = vmatpush1.bf16.msra.mxu0 0
  %454 = vmatprep.mubr.bf16.mxu0 %v401
  %455 = vmatmul.mubr.bf16.gmra.mrb[0].mxu0 %v316
  %v456 = vpop.f32.mrb[0].mxu0
  %v457 = vadd.f32 0.0, %v456
  %v458 = vpop.f32.mrb[0].mxu0
  %v459 = vpop.f32.mrb[0].mxu0
  %v460 = vadd.f32 0.0, %v459
  %v461 = vpop.f32.mrb[0].mxu0
  %462 = vmatprep.mubr.bf16.mxu0 %v404
  %463 = vmatmul.mubr.bf16.gmra.mrb[0].mxu0 %v318
  %v464 = vpop.f32.mrb[0].mxu0
  %v465 = vadd.f32 0.0, %v464
  %v466 = vpop.f32.mrb[0].mxu0
  %v467 = vpop.f32.mrb[0].mxu0
  %v468 = vadd.f32 0.0, %v467
  %v469 = vpop.f32.mrb[0].mxu0
  %470 = vmatprep.mubr.bf16.mxu0 %v407
  %471 = vmatmul.mubr.bf16.gmra.mrb[0].mxu0 %v320
  %v472 = vpop.f32.mrb[0].mxu0
  %v473 = vadd.f32 0.0, %v472
  %v474 = vpop.f32.mrb[0].mxu0
  %v475 = vpop.f32.mrb[0].mxu0
  %v476 = vadd.f32 0.0, %v475
  %v477 = vpop.f32.mrb[0].mxu0
  %478 = vmatprep.mubr.bf16.mxu0 %v410
  %479 = vmatmul.mubr.bf16.gmra.mrb[0].mxu0 %v322
  %v480 = vpop.f32.mrb[0].mxu0
  %v481 = vadd.f32 0.0, %v480
  %v482 = vpop.f32.mrb[0].mxu0
  %v483 = vpop.f32.mrb[0].mxu0
  %v484 = vadd.f32 0.0, %v483
  %v485 = vpop.f32.mrb[0].mxu0
  %486 = vmatprep.mubr.bf16.mxu0 %v413
  %487 = vmatmul.mubr.bf16.gmra.mrb[0].mxu0 %v324
  %v488 = vpop.f32.mrb[0].mxu0
  %v489 = vadd.f32 0.0, %v488
  %v490 = vpop.f32.mrb[0].mxu0
  %v491 = vpop.f32.mrb[0].mxu0
  %v492 = vadd.f32 0.0, %v491
  %v493 = vpop.f32.mrb[0].mxu0
  %494 = vmatprep.mubr.bf16.mxu0 %v416
  %495 = vmatmul.mubr.bf16.gmra.mrb[0].mxu0 %v326
  %v496 = vpop.f32.mrb[0].mxu0
  %v497 = vadd.f32 0.0, %v496
  %v498 = vpop.f32.mrb[0].mxu0
  %v499 = vpop.f32.mrb[0].mxu0
  %v500 = vadd.f32 0.0, %v499
  %v501 = vpop.f32.mrb[0].mxu0
  %502 = vdwg.mxu0
  %s503 = scalar_lea.vmem %s1, 72
  %v504 = vld [vmem:[%s503] sm:$0xf]
  %v505 = vld [vmem:[%s503 + $0x4] sm:$0xf]
  %v506 = vld [vmem:[%s503 + $0x8] sm:$0xf]
  %v507 = vld [vmem:[%s503 + $0xc] sm:$0xf]
  %v508 = vld [vmem:[%s503 + $0x10] sm:$0xf]
  %v509 = vld [vmem:[%s503 + $0x14] sm:$0xf]
  %v510 = vld [vmem:[%s503 + $0x18] sm:$0xf]
  %v511 = vld [vmem:[%s503 + $0x1c] sm:$0xf]
  %v512 = vld [vmem:[%s503 + $0x20] sm:$0xf]
  %v513 = vld [vmem:[%s503 + $0x24] sm:$0xf]
  %v514 = vld [vmem:[%s503 + $0x28] sm:$0xf]
  %v515 = vld [vmem:[%s503 + $0x2c] sm:$0xf]
  %v516 = vld [vmem:[%s503 + $0x30] sm:$0xf]
  %v517 = vld [vmem:[%s503 + $0x34] sm:$0xf]
  %v518 = vld [vmem:[%s503 + $0x38] sm:$0xf]
  %v519 = vld [vmem:[%s503 + $0x3c] sm:$0xf]
  %v520 = vld [vmem:[%s503 + $0x40] sm:$0xf]
  %v521 = vld [vmem:[%s503 + $0x44] sm:$0x3]
  %v540 = vunpack.c.l.b16 %v504
  %v541 = vunpack.c.l.b16 %v505
  %v542 = vunpack.c.l.b16 %v506
  %v543 = vunpack.c.l.b16 %v507
  %v544 = vunpack.c.l.b16 %v508
  %v545 = vunpack.c.l.b16 %v509
  %v546 = vunpack.c.l.b16 %v510
  %v547 = vunpack.c.l.b16 %v511
  %v548 = vunpack.c.l.b16 %v512
  %v549 = vunpack.c.l.b16 %v513
  %v550 = vunpack.c.l.b16 %v514
  %v551 = vunpack.c.l.b16 %v515
  %v552 = vunpack.c.l.b16 %v516
  %v553 = vunpack.c.l.b16 %v517
  %v554 = vunpack.c.l.b16 %v518
  %v555 = vunpack.c.l.b16 %v519
  %v556 = vunpack.c.l.b16 %v520
  %v557 = vunpack.c.l.b16 %v521
  %v558 = vpack.c.b16 %v541, %v540
  %v559 = vpack.c.b16 %v543, %v542
  %v560 = vpack.c.b16 %v545, %v544
  %v561 = vpack.c.b16 %v547, %v546
  %v562 = vpack.c.b16 %v549, %v548
  %v563 = vpack.c.b16 %v551, %v550
  %v564 = vpack.c.b16 %v553, %v552
  %v565 = vpack.c.b16 %v555, %v554
  %v566 = vpack.c.b16 %v557, %v556
  %v576 = vsel %vm418, %v566, 0
  %578 = vmatprep.subr.bf16.mxu0 0
  %579 = vmatpush1.bf16.msra.mxu0 %v558
  %580 = vmatprep.subr.bf16.mxu0 0
  %581 = vmatpush1.bf16.msra.mxu0 %v559
  %582 = vmatprep.subr.bf16.mxu0 0
  %583 = vmatpush1.bf16.msra.mxu0 %v560
  %584 = vmatprep.subr.bf16.mxu0 0
  %585 = vmatpush1.bf16.msra.mxu0 %v561
  %586 = vmatprep.subr.bf16.mxu0 0
  %587 = vmatpush1.bf16.msra.mxu0 %v562
  %588 = vmatprep.subr.bf16.mxu0 0
  %589 = vmatpush1.bf16.msra.mxu0 %v563
  %590 = vmatprep.subr.bf16.mxu0 0
  %591 = vmatpush1.bf16.msra.mxu0 %v564
  %592 = vmatprep.subr.bf16.mxu0 0
  %593 = vmatpush1.bf16.msra.mxu0 %v565
  %594 = vmatprep.subr.bf16.mxu0 0
  %595 = vmatpush1.bf16.msra.mxu0 %v576
  %596 = vmatprep.subr.bf16.mxu0 0
  %597 = vmatpush1.bf16.msra.mxu0 0
  %598 = vmatprep.subr.bf16.mxu0 0
  %599 = vmatpush1.bf16.msra.mxu0 0
  %600 = vmatprep.subr.bf16.mxu0 0
  %601 = vmatpush1.bf16.msra.mxu0 0
  %602 = vmatprep.subr.bf16.mxu0 0
  %603 = vmatpush1.bf16.msra.mxu0 0
  %604 = vmatprep.subr.bf16.mxu0 0
  %605 = vmatpush1.bf16.msra.mxu0 0
  %606 = vmatprep.subr.bf16.mxu0 0
  %607 = vmatpush1.bf16.msra.mxu0 0
  %608 = vmatprep.subr.bf16.mxu0 0
  %609 = vmatpush1.bf16.msra.mxu0 0
  %610 = vmatprep.mubr.bf16.mxu0 %v401
  %611 = vmatmul.mubr.bf16.gmra.mrb[0].mxu0 %v316
  %v612 = vpop.f32.mrb[0].mxu0
  %v613 = vadd.f32 0.0, %v612
  %v614 = vpop.f32.mrb[0].mxu0
  %v615 = vpop.f32.mrb[0].mxu0
  %v616 = vadd.f32 0.0, %v615
  %v617 = vpop.f32.mrb[0].mxu0
  %618 = vmatprep.mubr.bf16.mxu0 %v404
  %619 = vmatmul.mubr.bf16.gmra.mrb[0].mxu0 %v318
  %v620 = vpop.f32.mrb[0].mxu0
  %v621 = vadd.f32 0.0, %v620
  %v622 = vpop.f32.mrb[0].mxu0
  %v623 = vpop.f32.mrb[0].mxu0
  %v624 = vadd.f32 0.0, %v623
  %v625 = vpop.f32.mrb[0].mxu0
  %626 = vmatprep.mubr.bf16.mxu0 %v407
  %627 = vmatmul.mubr.bf16.gmra.mrb[0].mxu0 %v320
  %v628 = vpop.f32.mrb[0].mxu0
  %v629 = vadd.f32 0.0, %v628
  %v630 = vpop.f32.mrb[0].mxu0
  %v631 = vpop.f32.mrb[0].mxu0
  %v632 = vadd.f32 0.0, %v631
  %v633 = vpop.f32.mrb[0].mxu0
  %634 = vmatprep.mubr.bf16.mxu0 %v410
  %635 = vmatmul.mubr.bf16.gmra.mrb[0].mxu0 %v322
  %v636 = vpop.f32.mrb[0].mxu0
  %v637 = vadd.f32 0.0, %v636
  %v638 = vpop.f32.mrb[0].mxu0
  %v639 = vpop.f32.mrb[0].mxu0
  %v640 = vadd.f32 0.0, %v639
  %v641 = vpop.f32.mrb[0].mxu0
  %642 = vmatprep.mubr.bf16.mxu0 %v413
  %643 = vmatmul.mubr.bf16.gmra.mrb[0].mxu0 %v324
  %v644 = vpop.f32.mrb[0].mxu0
  %v645 = vadd.f32 0.0, %v644
  %v646 = vpop.f32.mrb[0].mxu0
  %v647 = vpop.f32.mrb[0].mxu0
  %v648 = vadd.f32 0.0, %v647
  %v649 = vpop.f32.mrb[0].mxu0
  %650 = vmatprep.mubr.bf16.mxu0 %v416
  %651 = vmatmul.mubr.bf16.gmra.mrb[0].mxu0 %v326
  %v652 = vpop.f32.mrb[0].mxu0
  %v653 = vadd.f32 0.0, %v652
  %v654 = vpop.f32.mrb[0].mxu0
  %v655 = vpop.f32.mrb[0].mxu0
  %v656 = vadd.f32 0.0, %v655
  %v657 = vpop.f32.mrb[0].mxu0
  %658 = vdwg.mxu0
  %v659 = vmax.f32 %v457, %v613
  %v660 = vmax.f32 %v460, %v616
  %v661 = vmax.f32 %v465, %v621
  %v662 = vmax.f32 %v468, %v624
  %v663 = vmax.f32 %v473, %v629
  %v664 = vmax.f32 %v476, %v632
  %v665 = vmax.f32 %v481, %v637
  %v666 = vmax.f32 %v484, %v640
  %v667 = vmax.f32 %v489, %v645
  %v668 = vmax.f32 %v492, %v648
  %v669 = vmax.f32 %v497, %v653
  %v670 = vmax.f32 %v500, %v656
  %671 = vrot.lane.b32.xlu0 %v43, 28
  %v672 = vpop.permute.xlu0 %671
  %673 = vrot.lane.b32.xlu0 %v47, 28
  %v674 = vpop.permute.xlu0 %673
  %675 = vrot.lane.b32.xlu0 %v51, 28
  %v676 = vpop.permute.xlu0 %675
  %677 = vrot.lane.b32.xlu0 %v55, 28
  %v678 = vpop.permute.xlu0 %677
  %679 = vrot.lane.b32.xlu0 %v59, 28
  %v680 = vpop.permute.xlu0 %679
  %681 = vrot.lane.b32.xlu0 %v63, 28
  %v682 = vpop.permute.xlu0 %681
  %683 = vrot.lane.b32.xlu0 %v67, 28
  %v684 = vpop.permute.xlu0 %683
  %685 = vrot.lane.b32.xlu0 %v71, 28
  %v686 = vpop.permute.xlu0 %685
  %687 = vrot.lane.b32.xlu0 %v75, 28
  %v688 = vpop.permute.xlu0 %687
  %689 = vrot.lane.b32.xlu0 %v79, 28
  %v690 = vpop.permute.xlu0 %689
  %691 = vrot.lane.b32.xlu0 %v83, 28
  %v692 = vpop.permute.xlu0 %691
  %693 = vrot.lane.b32.xlu0 %v87, 28
  %v694 = vpop.permute.xlu0 %693
  %707 = vrot.lane.b32.xlu0 %v45, 56
  %v708 = vpop.permute.xlu0 %707
  %709 = vrot.lane.b32.xlu0 %v49, 56
  %v710 = vpop.permute.xlu0 %709
  %711 = vrot.lane.b32.xlu0 %v53, 56
  %v712 = vpop.permute.xlu0 %711
  %713 = vrot.lane.b32.xlu0 %v57, 56
  %v714 = vpop.permute.xlu0 %713
  %715 = vrot.lane.b32.xlu0 %v61, 56
  %v716 = vpop.permute.xlu0 %715
  %717 = vrot.lane.b32.xlu0 %v65, 56
  %v718 = vpop.permute.xlu0 %717
  %719 = vrot.lane.b32.xlu0 %v69, 56
  %v720 = vpop.permute.xlu0 %719
  %721 = vrot.lane.b32.xlu0 %v73, 56
  %v722 = vpop.permute.xlu0 %721
  %723 = vrot.lane.b32.xlu0 %v77, 56
  %v724 = vpop.permute.xlu0 %723
  %725 = vrot.lane.b32.xlu0 %v81, 56
  %v726 = vpop.permute.xlu0 %725
  %727 = vrot.lane.b32.xlu0 %v85, 56
  %v728 = vpop.permute.xlu0 %727
  %729 = vrot.lane.b32.xlu0 %v89, 56
  %v730 = vpop.permute.xlu0 %729
  %743 = vrot.lane.b32.xlu0 %v47, 84
  %v744 = vpop.permute.xlu0 %743
  %745 = vrot.lane.b32.xlu0 %v51, 84
  %v746 = vpop.permute.xlu0 %745
  %747 = vrot.lane.b32.xlu0 %v55, 84
  %v748 = vpop.permute.xlu0 %747
  %749 = vrot.lane.b32.xlu0 %v59, 84
  %v750 = vpop.permute.xlu0 %749
  %751 = vrot.lane.b32.xlu0 %v63, 84
  %v752 = vpop.permute.xlu0 %751
  %753 = vrot.lane.b32.xlu0 %v67, 84
  %v754 = vpop.permute.xlu0 %753
  %755 = vrot.lane.b32.xlu0 %v71, 84
  %v756 = vpop.permute.xlu0 %755
  %757 = vrot.lane.b32.xlu0 %v75, 84
  %v758 = vpop.permute.xlu0 %757
  %759 = vrot.lane.b32.xlu0 %v79, 84
  %v760 = vpop.permute.xlu0 %759
  %761 = vrot.lane.b32.xlu0 %v83, 84
  %v762 = vpop.permute.xlu0 %761
  %763 = vrot.lane.b32.xlu0 %v87, 84
  %v764 = vpop.permute.xlu0 %763
  %765 = vrot.lane.b32.xlu0 %v91, 84
  %v766 = vpop.permute.xlu0 %765
  %780 = vrot.lane.b32.xlu0 %v49, 112
  %v781 = vpop.permute.xlu0 %780
  %782 = vrot.lane.b32.xlu0 %v53, 112
  %v783 = vpop.permute.xlu0 %782
  %784 = vrot.lane.b32.xlu0 %v57, 112
  %v785 = vpop.permute.xlu0 %784
  %786 = vrot.lane.b32.xlu0 %v61, 112
  %v787 = vpop.permute.xlu0 %786
  %788 = vrot.lane.b32.xlu0 %v65, 112
  %v789 = vpop.permute.xlu0 %788
  %790 = vrot.lane.b32.xlu0 %v69, 112
  %v791 = vpop.permute.xlu0 %790
  %792 = vrot.lane.b32.xlu0 %v73, 112
  %v793 = vpop.permute.xlu0 %792
  %794 = vrot.lane.b32.xlu0 %v77, 112
  %v795 = vpop.permute.xlu0 %794
  %796 = vrot.lane.b32.xlu0 %v81, 112
  %v797 = vpop.permute.xlu0 %796
  %798 = vrot.lane.b32.xlu0 %v85, 112
  %v799 = vpop.permute.xlu0 %798
  %800 = vrot.lane.b32.xlu0 %v89, 112
  %v801 = vpop.permute.xlu0 %800
  %802 = vrot.lane.b32.xlu0 %v93, 112
  %v803 = vpop.permute.xlu0 %802
  %v816 = vsel %vm264, %v41, %v672
  %v817 = vsel %vm264, %v45, %v674
  %v818 = vsel %vm264, %v49, %v676
  %v819 = vsel %vm264, %v53, %v678
  %v820 = vsel %vm264, %v57, %v680
  %v821 = vsel %vm264, %v61, %v682
  %v822 = vsel %vm264, %v65, %v684
  %v823 = vsel %vm264, %v69, %v686
  %v824 = vsel %vm264, %v73, %v688
  %v825 = vsel %vm264, %v77, %v690
  %v826 = vsel %vm264, %v81, %v692
  %v827 = vsel %vm264, %v85, %v694
  %v828 = vsel %vm277, %v816, %v708
  %v829 = vsel %vm277, %v817, %v710
  %v830 = vsel %vm277, %v818, %v712
  %v831 = vsel %vm277, %v819, %v714
  %v832 = vsel %vm277, %v820, %v716
  %v833 = vsel %vm277, %v821, %v718
  %v834 = vsel %vm277, %v822, %v720
  %v835 = vsel %vm277, %v823, %v722
  %v836 = vsel %vm277, %v824, %v724
  %v837 = vsel %vm277, %v825, %v726
  %v838 = vsel %vm277, %v826, %v728
  %v839 = vsel %vm277, %v827, %v730
  %v840 = vsel %vm290, %v828, %v744
  %v841 = vsel %vm290, %v829, %v746
  %v842 = vsel %vm290, %v830, %v748
  %v843 = vsel %vm290, %v831, %v750
  %v844 = vsel %vm290, %v832, %v752
  %v845 = vsel %vm290, %v833, %v754
  %v846 = vsel %vm290, %v834, %v756
  %v847 = vsel %vm290, %v835, %v758
  %v848 = vsel %vm290, %v836, %v760
  %v849 = vsel %vm290, %v837, %v762
  %v850 = vsel %vm290, %v838, %v764
  %v851 = vsel %vm290, %v839, %v766
  %v852 = vsel %vm303, %v840, %v781
  %v853 = vsel %vm303, %v841, %v783
  %v854 = vsel %vm303, %v842, %v785
  %v855 = vsel %vm303, %v843, %v787
  %v856 = vsel %vm303, %v844, %v789
  %v857 = vsel %vm303, %v845, %v791
  %v858 = vsel %vm303, %v846, %v793
  %v859 = vsel %vm303, %v847, %v795
  %v860 = vsel %vm303, %v848, %v797
  %v861 = vsel %vm303, %v849, %v799
  %v862 = vsel %vm303, %v850, %v801
  %v863 = vsel %vm303, %v851, %v803
  %v864 = vpack.c.bf16 %v853, %v852
  %v865 = vpack.c.bf16 %v783, %v781
  %v866 = vpack.c.bf16 %v855, %v854
  %v867 = vpack.c.bf16 %v787, %v785
  %v868 = vpack.c.bf16 %v857, %v856
  %v869 = vpack.c.bf16 %v791, %v789
  %v870 = vpack.c.bf16 %v859, %v858
  %v871 = vpack.c.bf16 %v795, %v793
  %v872 = vpack.c.bf16 %v861, %v860
  %v873 = vpack.c.bf16 %v799, %v797
  %v874 = vpack.c.bf16 %v863, %v862
  %v875 = vpack.c.bf16 %v803, %v801
  %v877 = vsel %vm399, %v865, 0
  %v880 = vsel %vm399, %v867, 0
  %v883 = vsel %vm399, %v869, 0
  %v886 = vsel %vm399, %v871, 0
  %v889 = vsel %vm399, %v873, 0
  %v892 = vsel %vm399, %v875, 0
  %894 = vmatprep.subr.bf16.mxu0 0
  %895 = vmatpush1.bf16.msra.mxu0 %v382
  %896 = vmatprep.subr.bf16.mxu0 0
  %897 = vmatpush1.bf16.msra.mxu0 %v383
  %898 = vmatprep.subr.bf16.mxu0 0
  %899 = vmatpush1.bf16.msra.mxu0 %v384
  %900 = vmatprep.subr.bf16.mxu0 0
  %901 = vmatpush1.bf16.msra.mxu0 %v385
  %902 = vmatprep.subr.bf16.mxu0 0
  %903 = vmatpush1.bf16.msra.mxu0 %v386
  %904 = vmatprep.subr.bf16.mxu0 0
  %905 = vmatpush1.bf16.msra.mxu0 %v387
  %906 = vmatprep.subr.bf16.mxu0 0
  %907 = vmatpush1.bf16.msra.mxu0 %v388
  %908 = vmatprep.subr.bf16.mxu0 0
  %909 = vmatpush1.bf16.msra.mxu0 %v389
  %910 = vmatprep.subr.bf16.mxu0 0
  %911 = vmatpush1.bf16.msra.mxu0 %v420
  %912 = vmatprep.subr.bf16.mxu0 0
  %913 = vmatpush1.bf16.msra.mxu0 0
  %914 = vmatprep.subr.bf16.mxu0 0
  %915 = vmatpush1.bf16.msra.mxu0 0
  %916 = vmatprep.subr.bf16.mxu0 0
  %917 = vmatpush1.bf16.msra.mxu0 0
  %918 = vmatprep.subr.bf16.mxu0 0
  %919 = vmatpush1.bf16.msra.mxu0 0
  %920 = vmatprep.subr.bf16.mxu0 0
  %921 = vmatpush1.bf16.msra.mxu0 0
  %922 = vmatprep.subr.bf16.mxu0 0
  %923 = vmatpush1.bf16.msra.mxu0 0
  %924 = vmatprep.subr.bf16.mxu0 0
  %925 = vmatpush1.bf16.msra.mxu0 0
  %926 = vmatprep.mubr.bf16.mxu0 %v877
  %927 = vmatmul.mubr.bf16.gmra.mrb[0].mxu0 %v864
  %v928 = vpop.f32.mrb[0].mxu0
  %v929 = vadd.f32 0.0, %v928
  %v930 = vpop.f32.mrb[0].mxu0
  %v931 = vpop.f32.mrb[0].mxu0
  %v932 = vadd.f32 0.0, %v931
  %v933 = vpop.f32.mrb[0].mxu0
  %934 = vmatprep.mubr.bf16.mxu0 %v880
  %935 = vmatmul.mubr.bf16.gmra.mrb[0].mxu0 %v866
  %v936 = vpop.f32.mrb[0].mxu0
  %v937 = vadd.f32 0.0, %v936
  %v938 = vpop.f32.mrb[0].mxu0
  %v939 = vpop.f32.mrb[0].mxu0
  %v940 = vadd.f32 0.0, %v939
  %v941 = vpop.f32.mrb[0].mxu0
  %942 = vmatprep.mubr.bf16.mxu0 %v883
  %943 = vmatmul.mubr.bf16.gmra.mrb[0].mxu0 %v868
  %v944 = vpop.f32.mrb[0].mxu0
  %v945 = vadd.f32 0.0, %v944
  %v946 = vpop.f32.mrb[0].mxu0
  %v947 = vpop.f32.mrb[0].mxu0
  %v948 = vadd.f32 0.0, %v947
  %v949 = vpop.f32.mrb[0].mxu0
  %950 = vmatprep.mubr.bf16.mxu0 %v886
  %951 = vmatmul.mubr.bf16.gmra.mrb[0].mxu0 %v870
  %v952 = vpop.f32.mrb[0].mxu0
  %v953 = vadd.f32 0.0, %v952
  %v954 = vpop.f32.mrb[0].mxu0
  %v955 = vpop.f32.mrb[0].mxu0
  %v956 = vadd.f32 0.0, %v955
  %v957 = vpop.f32.mrb[0].mxu0
  %958 = vmatprep.mubr.bf16.mxu0 %v889
  %959 = vmatmul.mubr.bf16.gmra.mrb[0].mxu0 %v872
  %v960 = vpop.f32.mrb[0].mxu0
  %v961 = vadd.f32 0.0, %v960
  %v962 = vpop.f32.mrb[0].mxu0
  %v963 = vpop.f32.mrb[0].mxu0
  %v964 = vadd.f32 0.0, %v963
  %v965 = vpop.f32.mrb[0].mxu0
  %966 = vmatprep.mubr.bf16.mxu0 %v892
  %967 = vmatmul.mubr.bf16.gmra.mrb[0].mxu0 %v874
  %v968 = vpop.f32.mrb[0].mxu0
  %v969 = vadd.f32 0.0, %v968
  %v970 = vpop.f32.mrb[0].mxu0
  %v971 = vpop.f32.mrb[0].mxu0
  %v972 = vadd.f32 0.0, %v971
  %v973 = vpop.f32.mrb[0].mxu0
  %974 = vdwg.mxu0
  %v975 = vmax.f32 %v659, %v929
  %v976 = vmax.f32 %v660, %v932
  %v977 = vmax.f32 %v661, %v937
  %v978 = vmax.f32 %v662, %v940
  %v979 = vmax.f32 %v663, %v945
  %v980 = vmax.f32 %v664, %v948
  %v981 = vmax.f32 %v665, %v953
  %v982 = vmax.f32 %v666, %v956
  %v983 = vmax.f32 %v667, %v961
  %v984 = vmax.f32 %v668, %v964
  %v985 = vmax.f32 %v669, %v969
  %v986 = vmax.f32 %v670, %v972
  %987 = vmatprep.subr.bf16.mxu0 0
  %988 = vmatpush1.bf16.msra.mxu0 %v558
  %989 = vmatprep.subr.bf16.mxu0 0
  %990 = vmatpush1.bf16.msra.mxu0 %v559
  %991 = vmatprep.subr.bf16.mxu0 0
  %992 = vmatpush1.bf16.msra.mxu0 %v560
  %993 = vmatprep.subr.bf16.mxu0 0
  %994 = vmatpush1.bf16.msra.mxu0 %v561
  %995 = vmatprep.subr.bf16.mxu0 0
  %996 = vmatpush1.bf16.msra.mxu0 %v562
  %997 = vmatprep.subr.bf16.mxu0 0
  %998 = vmatpush1.bf16.msra.mxu0 %v563
  %999 = vmatprep.subr.bf16.mxu0 0
  %1000 = vmatpush1.bf16.msra.mxu0 %v564
  %1001 = vmatprep.subr.bf16.mxu0 0
  %1002 = vmatpush1.bf16.msra.mxu0 %v565
  %1003 = vmatprep.subr.bf16.mxu0 0
  %1004 = vmatpush1.bf16.msra.mxu0 %v576
  %1005 = vmatprep.subr.bf16.mxu0 0
  %1006 = vmatpush1.bf16.msra.mxu0 0
  %1007 = vmatprep.subr.bf16.mxu0 0
  %1008 = vmatpush1.bf16.msra.mxu0 0
  %1009 = vmatprep.subr.bf16.mxu0 0
  %1010 = vmatpush1.bf16.msra.mxu0 0
  %1011 = vmatprep.subr.bf16.mxu0 0
  %1012 = vmatpush1.bf16.msra.mxu0 0
  %1013 = vmatprep.subr.bf16.mxu0 0
  %1014 = vmatpush1.bf16.msra.mxu0 0
  %1015 = vmatprep.subr.bf16.mxu0 0
  %1016 = vmatpush1.bf16.msra.mxu0 0
  %1017 = vmatprep.subr.bf16.mxu0 0
  %1018 = vmatpush1.bf16.msra.mxu0 0
  %1019 = vmatprep.mubr.bf16.mxu0 %v877
  %1020 = vmatmul.mubr.bf16.gmra.mrb[0].mxu0 %v864
  %v1021 = vpop.f32.mrb[0].mxu0
  %v1022 = vadd.f32 0.0, %v1021
  %v1023 = vpop.f32.mrb[0].mxu0
  %v1024 = vpop.f32.mrb[0].mxu0
  %v1025 = vadd.f32 0.0, %v1024
  %v1026 = vpop.f32.mrb[0].mxu0
  %1027 = vmatprep.mubr.bf16.mxu0 %v880
  %1028 = vmatmul.mubr.bf16.gmra.mrb[0].mxu0 %v866
  %v1029 = vpop.f32.mrb[0].mxu0
  %v1030 = vadd.f32 0.0, %v1029
  %v1031 = vpop.f32.mrb[0].mxu0
  %v1032 = vpop.f32.mrb[0].mxu0
  %v1033 = vadd.f32 0.0, %v1032
  %v1034 = vpop.f32.mrb[0].mxu0
  %1035 = vmatprep.mubr.bf16.mxu0 %v883
  %1036 = vmatmul.mubr.bf16.gmra.mrb[0].mxu0 %v868
  %v1037 = vpop.f32.mrb[0].mxu0
  %v1038 = vadd.f32 0.0, %v1037
  %v1039 = vpop.f32.mrb[0].mxu0
  %v1040 = vpop.f32.mrb[0].mxu0
  %v1041 = vadd.f32 0.0, %v1040
  %v1042 = vpop.f32.mrb[0].mxu0
  %1043 = vmatprep.mubr.bf16.mxu0 %v886
  %1044 = vmatmul.mubr.bf16.gmra.mrb[0].mxu0 %v870
  %v1045 = vpop.f32.mrb[0].mxu0
  %v1046 = vadd.f32 0.0, %v1045
  %v1047 = vpop.f32.mrb[0].mxu0
  %v1048 = vpop.f32.mrb[0].mxu0
  %v1049 = vadd.f32 0.0, %v1048
  %v1050 = vpop.f32.mrb[0].mxu0
  %1051 = vmatprep.mubr.bf16.mxu0 %v889
  %1052 = vmatmul.mubr.bf16.gmra.mrb[0].mxu0 %v872
  %v1053 = vpop.f32.mrb[0].mxu0
  %v1054 = vadd.f32 0.0, %v1053
  %v1055 = vpop.f32.mrb[0].mxu0
  %v1056 = vpop.f32.mrb[0].mxu0
  %v1057 = vadd.f32 0.0, %v1056
  %v1058 = vpop.f32.mrb[0].mxu0
  %1059 = vmatprep.mubr.bf16.mxu0 %v892
  %1060 = vmatmul.mubr.bf16.gmra.mrb[0].mxu0 %v874
  %v1061 = vpop.f32.mrb[0].mxu0
  %v1062 = vadd.f32 0.0, %v1061
  %v1063 = vpop.f32.mrb[0].mxu0
  %v1064 = vpop.f32.mrb[0].mxu0
  %v1065 = vadd.f32 0.0, %v1064
  %v1066 = vpop.f32.mrb[0].mxu0
  %1067 = vdwg.mxu0
  %v1068 = vmax.f32 %v975, %v1022
  %v1069 = vmax.f32 %v976, %v1025
  %v1070 = vmax.f32 %v977, %v1030
  %v1071 = vmax.f32 %v978, %v1033
  %v1072 = vmax.f32 %v979, %v1038
  %v1073 = vmax.f32 %v980, %v1041
  %v1074 = vmax.f32 %v981, %v1046
  %v1075 = vmax.f32 %v982, %v1049
  %v1076 = vmax.f32 %v983, %v1054
  %v1077 = vmax.f32 %v984, %v1057
  %v1078 = vmax.f32 %v985, %v1062
  %v1079 = vmax.f32 %v986, %v1065
  %v1080 = vld [vmem:[%s2] sm:$0x1]
  %v1082 = vlaneseq
  %v1083 = vshrl.u32 %v1082, 7
  %v1084 = vsub.s32 0, %v1083
  %v1085 = vrot.slane %v1080, %v1084
  %v1087 = vadd.f32 %v1068, %v1085
  %v1088 = vadd.f32 %v1069, %v1085
  %v1089 = vadd.f32 %v1070, %v1085
  %v1090 = vadd.f32 %v1071, %v1085
  %v1091 = vadd.f32 %v1072, %v1085
  %v1092 = vadd.f32 %v1073, %v1085
  %v1093 = vadd.f32 %v1074, %v1085
  %v1094 = vadd.f32 %v1075, %v1085
  %v1095 = vadd.f32 %v1076, %v1085
  %v1096 = vadd.f32 %v1077, %v1085
  %v1097 = vadd.f32 %v1078, %v1085
  %v1098 = vadd.f32 %v1079, %v1085
  %v1099 = vmax.f32 %v1087, 0.0
  %v1100 = vmax.f32 %v1088, 0.0
  %v1101 = vmax.f32 %v1089, 0.0
  %v1102 = vmax.f32 %v1090, 0.0
  %v1103 = vmax.f32 %v1091, 0.0
  %v1104 = vmax.f32 %v1092, 0.0
  %v1105 = vmax.f32 %v1093, 0.0
  %v1106 = vmax.f32 %v1094, 0.0
  %v1107 = vmax.f32 %v1095, 0.0
  %v1108 = vmax.f32 %v1096, 0.0
  %v1109 = vmax.f32 %v1097, 0.0
  %v1110 = vmax.f32 %v1098, 0.0
  %1115 = vrot.lane.b32.xlu0 %v1100, 72
  %v1116 = vpop.permute.xlu0 %1115
  %1117 = vrot.lane.b32.xlu0 %v1102, 72
  %v1118 = vpop.permute.xlu0 %1117
  %1119 = vrot.lane.b32.xlu0 %v1104, 72
  %v1120 = vpop.permute.xlu0 %1119
  %1121 = vrot.lane.b32.xlu0 %v1106, 72
  %v1122 = vpop.permute.xlu0 %1121
  %1131 = vrot.lane.b32.xlu0 %v1101, 16
  %v1132 = vpop.permute.xlu0 %1131
  %1133 = vrot.lane.b32.xlu0 %v1103, 16
  %v1134 = vpop.permute.xlu0 %1133
  %1135 = vrot.lane.b32.xlu0 %v1105, 16
  %v1136 = vpop.permute.xlu0 %1135
  %1137 = vrot.lane.b32.xlu0 %v1107, 16
  %v1138 = vpop.permute.xlu0 %1137
  %1144 = vrot.lane.b32.xlu0 %v1102, 88
  %v1145 = vpop.permute.xlu0 %1144
  %1146 = vrot.lane.b32.xlu0 %v1104, 88
  %v1147 = vpop.permute.xlu0 %1146
  %1148 = vrot.lane.b32.xlu0 %v1106, 88
  %v1149 = vpop.permute.xlu0 %1148
  %1150 = vrot.lane.b32.xlu0 %v1108, 88
  %v1151 = vpop.permute.xlu0 %1150
  %1157 = vrot.lane.b32.xlu0 %v1103, 32
  %v1158 = vpop.permute.xlu0 %1157
  %1159 = vrot.lane.b32.xlu0 %v1105, 32
  %v1160 = vpop.permute.xlu0 %1159
  %1161 = vrot.lane.b32.xlu0 %v1107, 32
  %v1162 = vpop.permute.xlu0 %1161
  %1163 = vrot.lane.b32.xlu0 %v1109, 32
  %v1164 = vpop.permute.xlu0 %1163
  %vm1169 = vcmask 588800
  %v1170 = vsel %vm1169, %v1099, %v1116
  %v1171 = vsel %vm1169, %v1101, %v1118
  %v1172 = vsel %vm1169, %v1103, %v1120
  %v1173 = vsel %vm1169, %v1105, %v1122
  %vm1174 = vcmask 130048
  %v1175 = vsel %vm1174, %v1116, %v1132
  %v1176 = vsel %vm1174, %v1118, %v1134
  %v1177 = vsel %vm1174, %v1120, %v1136
  %v1178 = vsel %vm1174, %v1122, %v1138
  %vm1179 = vcmask 719872
  %v1180 = vsel %vm1179, %v1175, %v1145
  %v1181 = vsel %vm1179, %v1176, %v1147
  %v1182 = vsel %vm1179, %v1177, %v1149
  %v1183 = vsel %vm1179, %v1178, %v1151
  %vm1184 = vcmask 261120
  %v1185 = vsel %vm1184, %v1145, %v1158
  %v1186 = vsel %vm1184, %v1147, %v1160
  %v1187 = vsel %vm1184, %v1149, %v1162
  %v1188 = vsel %vm1184, %v1151, %v1164
  %v1189 = vpack.c.bf16 %v1171, %v1170
  %v1190 = vpack.c.bf16 %v1181, %v1180
  %v1191 = vpack.c.bf16 %v1186, %v1185
  %v1192 = vpack.c.bf16 %v1173, %v1172
  %v1193 = vpack.c.bf16 %v1183, %v1182
  %v1194 = vpack.c.bf16 %v1188, %v1187
  %v1195 = vld [vmem:[%s3] sm:$0xf]
  %v1196 = vld [vmem:[%s3 + $0x4] sm:$0xf]
  %v1197 = vld [vmem:[%s3 + $0x8] sm:$0xf]
  %v1198 = vld [vmem:[%s3 + $0xc] sm:$0xf]
  %v1199 = vld [vmem:[%s3 + $0x10] sm:$0xf]
  %v1200 = vld [vmem:[%s3 + $0x14] sm:$0xf]
  %v1201 = vld [vmem:[%s3 + $0x18] sm:$0xf]
  %v1202 = vld [vmem:[%s3 + $0x1c] sm:$0xf]
  %v1203 = vld [vmem:[%s3 + $0x20] sm:$0xf]
  %v1204 = vld [vmem:[%s3 + $0x24] sm:$0xf]
  %v1205 = vld [vmem:[%s3 + $0x28] sm:$0xf]
  %v1206 = vld [vmem:[%s3 + $0x2c] sm:$0xf]
  %v1207 = vld [vmem:[%s3 + $0x30] sm:$0xf]
  %v1208 = vld [vmem:[%s3 + $0x34] sm:$0xf]
  %v1209 = vld [vmem:[%s3 + $0x38] sm:$0xf]
  %v1210 = vld [vmem:[%s3 + $0x3c] sm:$0xf]
  %v1211 = vld [vmem:[%s3 + $0x40] sm:$0xf]
  %v1212 = vld [vmem:[%s3 + $0x44] sm:$0xf]
  %v1213 = vld [vmem:[%s3 + $0x48] sm:$0xf]
  %v1214 = vld [vmem:[%s3 + $0x4c] sm:$0xf]
  %v1215 = vld [vmem:[%s3 + $0x50] sm:$0xf]
  %v1216 = vld [vmem:[%s3 + $0x54] sm:$0xf]
  %v1217 = vld [vmem:[%s3 + $0x58] sm:$0xf]
  %v1218 = vld [vmem:[%s3 + $0x5c] sm:$0xf]
  %v1219 = vld [vmem:[%s3 + $0x60] sm:$0xf]
  %v1220 = vld [vmem:[%s3 + $0x64] sm:$0xf]
  %v1221 = vld [vmem:[%s3 + $0x68] sm:$0xf]
  %v1222 = vld [vmem:[%s3 + $0x6c] sm:$0xf]
  %v1223 = vld [vmem:[%s3 + $0x70] sm:$0xf]
  %v1224 = vld [vmem:[%s3 + $0x74] sm:$0xf]
  %v1225 = vld [vmem:[%s3 + $0x78] sm:$0xf]
  %v1226 = vld [vmem:[%s3 + $0x7c] sm:$0xf]
  %v1227 = vld [vmem:[%s3 + $0x80] sm:$0xf]
  %v1228 = vld [vmem:[%s3 + $0x84] sm:$0xf]
  %v1229 = vld [vmem:[%s3 + $0x88] sm:$0xf]
  %v1230 = vld [vmem:[%s3 + $0x8c] sm:$0xf]
  %v1231 = vld [vmem:[%s3 + $0x90] sm:$0xf]
  %v1232 = vld [vmem:[%s3 + $0x94] sm:$0xf]
  %v1233 = vld [vmem:[%s3 + $0x98] sm:$0xf]
  %v1234 = vld [vmem:[%s3 + $0x9c] sm:$0xf]
  %v1235 = vld [vmem:[%s3 + $0xa0] sm:$0xf]
  %v1236 = vld [vmem:[%s3 + $0xa4] sm:$0xf]
  %v1237 = vld [vmem:[%s3 + $0xa8] sm:$0xf]
  %v1238 = vld [vmem:[%s3 + $0xac] sm:$0xf]
  %v1239 = vld [vmem:[%s3 + $0xb0] sm:$0xf]
  %v1285 = vunpack.c.l.b16 %v1195
  %v1286 = vunpack.c.l.b16 %v1196
  %v1287 = vunpack.c.l.b16 %v1197
  %v1288 = vunpack.c.l.b16 %v1198
  %v1289 = vunpack.c.l.b16 %v1199
  %v1290 = vunpack.c.l.b16 %v1200
  %v1291 = vunpack.c.l.b16 %v1201
  %v1292 = vunpack.c.l.b16 %v1202
  %v1293 = vunpack.c.l.b16 %v1203
  %v1294 = vunpack.c.l.b16 %v1204
  %v1295 = vunpack.c.l.b16 %v1205
  %v1296 = vunpack.c.l.b16 %v1206
  %v1297 = vunpack.c.l.b16 %v1207
  %v1298 = vunpack.c.l.b16 %v1208
  %v1299 = vunpack.c.l.b16 %v1209
  %v1300 = vunpack.c.l.b16 %v1210
  %v1301 = vunpack.c.l.b16 %v1211
  %v1302 = vunpack.c.l.b16 %v1212
  %v1303 = vunpack.c.l.b16 %v1213
  %v1304 = vunpack.c.l.b16 %v1214
  %v1305 = vunpack.c.l.b16 %v1215
  %v1306 = vunpack.c.l.b16 %v1216
  %v1307 = vunpack.c.l.b16 %v1217
  %v1308 = vunpack.c.l.b16 %v1218
  %v1309 = vunpack.c.l.b16 %v1219
  %v1310 = vunpack.c.l.b16 %v1220
  %v1311 = vunpack.c.l.b16 %v1221
  %v1312 = vunpack.c.l.b16 %v1222
  %v1313 = vunpack.c.l.b16 %v1223
  %v1314 = vunpack.c.l.b16 %v1224
  %v1315 = vunpack.c.l.b16 %v1225
  %v1316 = vunpack.c.l.b16 %v1226
  %v1317 = vunpack.c.l.b16 %v1227
  %v1318 = vunpack.c.l.b16 %v1228
  %v1319 = vunpack.c.l.b16 %v1229
  %v1320 = vunpack.c.l.b16 %v1230
  %v1321 = vunpack.c.l.b16 %v1231
  %v1322 = vunpack.c.l.b16 %v1232
  %v1323 = vunpack.c.l.b16 %v1233
  %v1324 = vunpack.c.l.b16 %v1234
  %v1325 = vunpack.c.l.b16 %v1235
  %v1326 = vunpack.c.l.b16 %v1236
  %v1327 = vunpack.c.l.b16 %v1237
  %v1328 = vunpack.c.l.b16 %v1238
  %v1329 = vunpack.c.l.b16 %v1239
  %v1330 = vpack.c.b16 %v1286, %v1285
  %v1331 = vpack.c.b16 %v1288, %v1287
  %v1332 = vpack.c.b16 %v1290, %v1289
  %v1333 = vpack.c.b16 %v1292, %v1291
  %v1334 = vpack.c.b16 %v1294, %v1293
  %v1335 = vpack.c.b16 %v1296, %v1295
  %v1336 = vpack.c.b16 %v1298, %v1297
  %v1337 = vpack.c.b16 %v1300, %v1299
  %v1338 = vpack.c.b16 %v1302, %v1301
  %v1339 = vpack.c.b16 %v1304, %v1303
  %v1340 = vpack.c.b16 %v1306, %v1305
  %v1341 = vpack.c.b16 %v1308, %v1307
  %v1342 = vpack.c.b16 %v1310, %v1309
  %v1343 = vpack.c.b16 %v1312, %v1311
  %v1344 = vpack.c.b16 %v1314, %v1313
  %v1345 = vpack.c.b16 %v1316, %v1315
  %v1346 = vpack.c.b16 %v1318, %v1317
  %v1347 = vpack.c.b16 %v1320, %v1319
  %v1348 = vpack.c.b16 %v1322, %v1321
  %v1349 = vpack.c.b16 %v1324, %v1323
  %v1350 = vpack.c.b16 %v1326, %v1325
  %v1351 = vpack.c.b16 %v1328, %v1327
  %v1352 = vpack.c.b16 %v1329, %v1329
  %vm1375 = vcmask 850944
  %v1377 = vsel %vm1375, %v1191, 0
  %v1380 = vsel %vm1375, %v1194, 0
  %vm1382 = vcmask 1043456
  %v1384 = vsel %vm1382, %v1352, 0
  %1386 = vmatprep.subr.bf16.mxu0 0
  %1387 = vmatpush1.bf16.msra.mxu0 %v1330
  %1388 = vmatprep.subr.bf16.mxu0 0
  %1389 = vmatpush1.bf16.msra.mxu0 %v1331
  %1390 = vmatprep.subr.bf16.mxu0 0
  %1391 = vmatpush1.bf16.msra.mxu0 %v1332
  %1392 = vmatprep.subr.bf16.mxu0 0
  %1393 = vmatpush1.bf16.msra.mxu0 %v1333
  %1394 = vmatprep.subr.bf16.mxu0 0
  %1395 = vmatpush1.bf16.msra.mxu0 %v1334
  %1396 = vmatprep.subr.bf16.mxu0 0
  %1397 = vmatpush1.bf16.msra.mxu0 %v1335
  %1398 = vmatprep.subr.bf16.mxu0 0
  %1399 = vmatpush1.bf16.msra.mxu0 %v1336
  %1400 = vmatprep.subr.bf16.mxu0 0
  %1401 = vmatpush1.bf16.msra.mxu0 %v1337
  %1402 = vmatprep.subr.bf16.mxu0 0
  %1403 = vmatpush1.bf16.msra.mxu0 %v1338
  %1404 = vmatprep.subr.bf16.mxu0 0
  %1405 = vmatpush1.bf16.msra.mxu0 %v1339
  %1406 = vmatprep.subr.bf16.mxu0 0
  %1407 = vmatpush1.bf16.msra.mxu0 %v1340
  %1408 = vmatprep.subr.bf16.mxu0 0
  %1409 = vmatpush1.bf16.msra.mxu0 %v1341
  %1410 = vmatprep.subr.bf16.mxu0 0
  %1411 = vmatpush1.bf16.msra.mxu0 %v1342
  %1412 = vmatprep.subr.bf16.mxu0 0
  %1413 = vmatpush1.bf16.msra.mxu0 %v1343
  %1414 = vmatprep.subr.bf16.mxu0 0
  %1415 = vmatpush1.bf16.msra.mxu0 %v1344
  %1416 = vmatprep.subr.bf16.mxu0 0
  %1417 = vmatpush1.bf16.msra.mxu0 %v1345
  %1418 = vmatprep.mubr.bf16.mxu0 %v1190
  %1419 = vmatmul.mubr.bf16.gmra.mrb[0].mxu0 %v1189
  %v1420 = vpop.f32.mrb[0].mxu0
  %v1421 = vadd.f32 0.0, %v1420
  %v1422 = vpop.f32.mrb[0].mxu0
  %v1423 = vpop.f32.mrb[0].mxu0
  %v1424 = vadd.f32 0.0, %v1423
  %v1425 = vpop.f32.mrb[0].mxu0
  %1426 = vmatprep.mubr.bf16.mxu0 %v1193
  %1427 = vmatmul.mubr.bf16.gmra.mrb[0].mxu0 %v1192
  %v1428 = vpop.f32.mrb[0].mxu0
  %v1429 = vadd.f32 0.0, %v1428
  %v1430 = vpop.f32.mrb[0].mxu0
  %v1431 = vpop.f32.mrb[0].mxu0
  %v1432 = vadd.f32 0.0, %v1431
  %v1433 = vpop.f32.mrb[0].mxu0
  %1434 = vdwg.mxu0
  %1435 = vmatprep.subr.bf16.mxu0 0
  %1436 = vmatpush1.bf16.msra.mxu0 %v1346
  %1437 = vmatprep.subr.bf16.mxu0 0
  %1438 = vmatpush1.bf16.msra.mxu0 %v1347
  %1439 = vmatprep.subr.bf16.mxu0 0
  %1440 = vmatpush1.bf16.msra.mxu0 %v1348
  %1441 = vmatprep.subr.bf16.mxu0 0
  %1442 = vmatpush1.bf16.msra.mxu0 %v1349
  %1443 = vmatprep.subr.bf16.mxu0 0
  %1444 = vmatpush1.bf16.msra.mxu0 %v1350
  %1445 = vmatprep.subr.bf16.mxu0 0
  %1446 = vmatpush1.bf16.msra.mxu0 %v1351
  %1447 = vmatprep.subr.bf16.mxu0 0
  %1448 = vmatpush1.bf16.msra.mxu0 %v1384
  %1449 = vmatprep.subr.bf16.mxu0 0
  %1450 = vmatpush1.bf16.msra.mxu0 0
  %1451 = vmatprep.subr.bf16.mxu0 0
  %1452 = vmatpush1.bf16.msra.mxu0 0
  %1453 = vmatprep.subr.bf16.mxu0 0
  %1454 = vmatpush1.bf16.msra.mxu0 0
  %1455 = vmatprep.subr.bf16.mxu0 0
  %1456 = vmatpush1.bf16.msra.mxu0 0
  %1457 = vmatprep.subr.bf16.mxu0 0
  %1458 = vmatpush1.bf16.msra.mxu0 0
  %1459 = vmatprep.subr.bf16.mxu0 0
  %1460 = vmatpush1.bf16.msra.mxu0 0
  %1461 = vmatprep.subr.bf16.mxu0 0
  %1462 = vmatpush1.bf16.msra.mxu0 0
  %1463 = vmatprep.subr.bf16.mxu0 0
  %1464 = vmatpush1.bf16.msra.mxu0 0
  %1465 = vmatprep.subr.bf16.mxu0 0
  %1466 = vmatpush1.bf16.msra.mxu0 0
  %1467 = vmatprep.mubr.bf16.mxu0 0
  %1468 = vmatmul.mubr.bf16.gmra.mrb[0].mxu0 %v1377
  %v1469 = vpop.f32.mrb[0].mxu0
  %v1470 = vadd.f32 %v1421, %v1469
  %v1471 = vpop.f32.mrb[0].mxu0
  %v1472 = vpop.f32.mrb[0].mxu0
  %v1473 = vadd.f32 %v1424, %v1472
  %v1474 = vpop.f32.mrb[0].mxu0
  %1475 = vmatprep.mubr.bf16.mxu0 0
  %1476 = vmatmul.mubr.bf16.gmra.mrb[0].mxu0 %v1380
  %v1477 = vpop.f32.mrb[0].mxu0
  %v1478 = vadd.f32 %v1429, %v1477
  %v1479 = vpop.f32.mrb[0].mxu0
  %v1480 = vpop.f32.mrb[0].mxu0
  %v1481 = vadd.f32 %v1432, %v1480
  %v1482 = vpop.f32.mrb[0].mxu0
  %1483 = vdwg.mxu0
  %s1484 = scalar_lea.vmem %s3, 180
  %v1485 = vld [vmem:[%s1484] sm:$0xf]
  %v1486 = vld [vmem:[%s1484 + $0x4] sm:$0xf]
  %v1487 = vld [vmem:[%s1484 + $0x8] sm:$0xf]
  %v1488 = vld [vmem:[%s1484 + $0xc] sm:$0xf]
  %v1489 = vld [vmem:[%s1484 + $0x10] sm:$0xf]
  %v1490 = vld [vmem:[%s1484 + $0x14] sm:$0xf]
  %v1491 = vld [vmem:[%s1484 + $0x18] sm:$0xf]
  %v1492 = vld [vmem:[%s1484 + $0x1c] sm:$0xf]
  %v1493 = vld [vmem:[%s1484 + $0x20] sm:$0xf]
  %v1494 = vld [vmem:[%s1484 + $0x24] sm:$0xf]
  %v1495 = vld [vmem:[%s1484 + $0x28] sm:$0xf]
  %v1496 = vld [vmem:[%s1484 + $0x2c] sm:$0xf]
  %v1497 = vld [vmem:[%s1484 + $0x30] sm:$0xf]
  %v1498 = vld [vmem:[%s1484 + $0x34] sm:$0xf]
  %v1499 = vld [vmem:[%s1484 + $0x38] sm:$0xf]
  %v1500 = vld [vmem:[%s1484 + $0x3c] sm:$0xf]
  %v1501 = vld [vmem:[%s1484 + $0x40] sm:$0xf]
  %v1502 = vld [vmem:[%s1484 + $0x44] sm:$0xf]
  %v1503 = vld [vmem:[%s1484 + $0x48] sm:$0xf]
  %v1504 = vld [vmem:[%s1484 + $0x4c] sm:$0xf]
  %v1505 = vld [vmem:[%s1484 + $0x50] sm:$0xf]
  %v1506 = vld [vmem:[%s1484 + $0x54] sm:$0xf]
  %v1507 = vld [vmem:[%s1484 + $0x58] sm:$0xf]
  %v1508 = vld [vmem:[%s1484 + $0x5c] sm:$0xf]
  %v1509 = vld [vmem:[%s1484 + $0x60] sm:$0xf]
  %v1510 = vld [vmem:[%s1484 + $0x64] sm:$0xf]
  %v1511 = vld [vmem:[%s1484 + $0x68] sm:$0xf]
  %v1512 = vld [vmem:[%s1484 + $0x6c] sm:$0xf]
  %v1513 = vld [vmem:[%s1484 + $0x70] sm:$0xf]
  %v1514 = vld [vmem:[%s1484 + $0x74] sm:$0xf]
  %v1515 = vld [vmem:[%s1484 + $0x78] sm:$0xf]
  %v1516 = vld [vmem:[%s1484 + $0x7c] sm:$0xf]
  %v1517 = vld [vmem:[%s1484 + $0x80] sm:$0xf]
  %v1518 = vld [vmem:[%s1484 + $0x84] sm:$0xf]
  %v1519 = vld [vmem:[%s1484 + $0x88] sm:$0xf]
  %v1520 = vld [vmem:[%s1484 + $0x8c] sm:$0xf]
  %v1521 = vld [vmem:[%s1484 + $0x90] sm:$0xf]
  %v1522 = vld [vmem:[%s1484 + $0x94] sm:$0xf]
  %v1523 = vld [vmem:[%s1484 + $0x98] sm:$0xf]
  %v1524 = vld [vmem:[%s1484 + $0x9c] sm:$0xf]
  %v1525 = vld [vmem:[%s1484 + $0xa0] sm:$0xf]
  %v1526 = vld [vmem:[%s1484 + $0xa4] sm:$0xf]
  %v1527 = vld [vmem:[%s1484 + $0xa8] sm:$0xf]
  %v1528 = vld [vmem:[%s1484 + $0xac] sm:$0xf]
  %v1529 = vld [vmem:[%s1484 + $0xb0] sm:$0xf]
  %v1575 = vunpack.c.l.b16 %v1485
  %v1576 = vunpack.c.l.b16 %v1486
  %v1577 = vunpack.c.l.b16 %v1487
  %v1578 = vunpack.c.l.b16 %v1488
  %v1579 = vunpack.c.l.b16 %v1489
  %v1580 = vunpack.c.l.b16 %v1490
  %v1581 = vunpack.c.l.b16 %v1491
  %v1582 = vunpack.c.l.b16 %v1492
  %v1583 = vunpack.c.l.b16 %v1493
  %v1584 = vunpack.c.l.b16 %v1494
  %v1585 = vunpack.c.l.b16 %v1495
  %v1586 = vunpack.c.l.b16 %v1496
  %v1587 = vunpack.c.l.b16 %v1497
  %v1588 = vunpack.c.l.b16 %v1498
  %v1589 = vunpack.c.l.b16 %v1499
  %v1590 = vunpack.c.l.b16 %v1500
  %v1591 = vunpack.c.l.b16 %v1501
  %v1592 = vunpack.c.l.b16 %v1502
  %v1593 = vunpack.c.l.b16 %v1503
  %v1594 = vunpack.c.l.b16 %v1504
  %v1595 = vunpack.c.l.b16 %v1505
  %v1596 = vunpack.c.l.b16 %v1506
  %v1597 = vunpack.c.l.b16 %v1507
  %v1598 = vunpack.c.l.b16 %v1508
  %v1599 = vunpack.c.l.b16 %v1509
  %v1600 = vunpack.c.l.b16 %v1510
  %v1601 = vunpack.c.l.b16 %v1511
  %v1602 = vunpack.c.l.b16 %v1512
  %v1603 = vunpack.c.l.b16 %v1513
  %v1604 = vunpack.c.l.b16 %v1514
  %v1605 = vunpack.c.l.b16 %v1515
  %v1606 = vunpack.c.l.b16 %v1516
  %v1607 = vunpack.c.l.b16 %v1517
  %v1608 = vunpack.c.l.b16 %v1518
  %v1609 = vunpack.c.l.b16 %v1519
  %v1610 = vunpack.c.l.b16 %v1520
  %v1611 = vunpack.c.l.b16 %v1521
  %v1612 = vunpack.c.l.b16 %v1522
  %v1613 = vunpack.c.l.b16 %v1523
  %v1614 = vunpack.c.l.b16 %v1524
  %v1615 = vunpack.c.l.b16 %v1525
  %v1616 = vunpack.c.l.b16 %v1526
  %v1617 = vunpack.c.l.b16 %v1527
  %v1618 = vunpack.c.l.b16 %v1528
  %v1619 = vunpack.c.l.b16 %v1529
  %v1620 = vpack.c.b16 %v1576, %v1575
  %v1621 = vpack.c.b16 %v1578, %v1577
  %v1622 = vpack.c.b16 %v1580, %v1579
  %v1623 = vpack.c.b16 %v1582, %v1581
  %v1624 = vpack.c.b16 %v1584, %v1583
  %v1625 = vpack.c.b16 %v1586, %v1585
  %v1626 = vpack.c.b16 %v1588, %v1587
  %v1627 = vpack.c.b16 %v1590, %v1589
  %v1628 = vpack.c.b16 %v1592, %v1591
  %v1629 = vpack.c.b16 %v1594, %v1593
  %v1630 = vpack.c.b16 %v1596, %v1595
  %v1631 = vpack.c.b16 %v1598, %v1597
  %v1632 = vpack.c.b16 %v1600, %v1599
  %v1633 = vpack.c.b16 %v1602, %v1601
  %v1634 = vpack.c.b16 %v1604, %v1603
  %v1635 = vpack.c.b16 %v1606, %v1605
  %v1636 = vpack.c.b16 %v1608, %v1607
  %v1637 = vpack.c.b16 %v1610, %v1609
  %v1638 = vpack.c.b16 %v1612, %v1611
  %v1639 = vpack.c.b16 %v1614, %v1613
  %v1640 = vpack.c.b16 %v1616, %v1615
  %v1641 = vpack.c.b16 %v1618, %v1617
  %v1642 = vpack.c.b16 %v1619, %v1619
  %v1666 = vsel %vm1382, %v1642, 0
  %1668 = vmatprep.subr.bf16.mxu0 0
  %1669 = vmatpush1.bf16.msra.mxu0 %v1620
  %1670 = vmatprep.subr.bf16.mxu0 0
  %1671 = vmatpush1.bf16.msra.mxu0 %v1621
  %1672 = vmatprep.subr.bf16.mxu0 0
  %1673 = vmatpush1.bf16.msra.mxu0 %v1622
  %1674 = vmatprep.subr.bf16.mxu0 0
  %1675 = vmatpush1.bf16.msra.mxu0 %v1623
  %1676 = vmatprep.subr.bf16.mxu0 0
  %1677 = vmatpush1.bf16.msra.mxu0 %v1624
  %1678 = vmatprep.subr.bf16.mxu0 0
  %1679 = vmatpush1.bf16.msra.mxu0 %v1625
  %1680 = vmatprep.subr.bf16.mxu0 0
  %1681 = vmatpush1.bf16.msra.mxu0 %v1626
  %1682 = vmatprep.subr.bf16.mxu0 0
  %1683 = vmatpush1.bf16.msra.mxu0 %v1627
  %1684 = vmatprep.subr.bf16.mxu0 0
  %1685 = vmatpush1.bf16.msra.mxu0 %v1628
  %1686 = vmatprep.subr.bf16.mxu0 0
  %1687 = vmatpush1.bf16.msra.mxu0 %v1629
  %1688 = vmatprep.subr.bf16.mxu0 0
  %1689 = vmatpush1.bf16.msra.mxu0 %v1630
  %1690 = vmatprep.subr.bf16.mxu0 0
  %1691 = vmatpush1.bf16.msra.mxu0 %v1631
  %1692 = vmatprep.subr.bf16.mxu0 0
  %1693 = vmatpush1.bf16.msra.mxu0 %v1632
  %1694 = vmatprep.subr.bf16.mxu0 0
  %1695 = vmatpush1.bf16.msra.mxu0 %v1633
  %1696 = vmatprep.subr.bf16.mxu0 0
  %1697 = vmatpush1.bf16.msra.mxu0 %v1634
  %1698 = vmatprep.subr.bf16.mxu0 0
  %1699 = vmatpush1.bf16.msra.mxu0 %v1635
  %1700 = vmatprep.mubr.bf16.mxu0 %v1190
  %1701 = vmatmul.mubr.bf16.gmra.mrb[0].mxu0 %v1189
  %v1702 = vpop.f32.mrb[0].mxu0
  %v1703 = vadd.f32 0.0, %v1702
  %v1704 = vpop.f32.mrb[0].mxu0
  %v1705 = vpop.f32.mrb[0].mxu0
  %v1706 = vadd.f32 0.0, %v1705
  %v1707 = vpop.f32.mrb[0].mxu0
  %1708 = vmatprep.mubr.bf16.mxu0 %v1193
  %1709 = vmatmul.mubr.bf16.gmra.mrb[0].mxu0 %v1192
  %v1710 = vpop.f32.mrb[0].mxu0
  %v1711 = vadd.f32 0.0, %v1710
  %v1712 = vpop.f32.mrb[0].mxu0
  %v1713 = vpop.f32.mrb[0].mxu0
  %v1714 = vadd.f32 0.0, %v1713
  %v1715 = vpop.f32.mrb[0].mxu0
  %1716 = vdwg.mxu0
  %1717 = vmatprep.subr.bf16.mxu0 0
  %1718 = vmatpush1.bf16.msra.mxu0 %v1636
  %1719 = vmatprep.subr.bf16.mxu0 0
  %1720 = vmatpush1.bf16.msra.mxu0 %v1637
  %1721 = vmatprep.subr.bf16.mxu0 0
  %1722 = vmatpush1.bf16.msra.mxu0 %v1638
  %1723 = vmatprep.subr.bf16.mxu0 0
  %1724 = vmatpush1.bf16.msra.mxu0 %v1639
  %1725 = vmatprep.subr.bf16.mxu0 0
  %1726 = vmatpush1.bf16.msra.mxu0 %v1640
  %1727 = vmatprep.subr.bf16.mxu0 0
  %1728 = vmatpush1.bf16.msra.mxu0 %v1641
  %1729 = vmatprep.subr.bf16.mxu0 0
  %1730 = vmatpush1.bf16.msra.mxu0 %v1666
  %1731 = vmatprep.subr.bf16.mxu0 0
  %1732 = vmatpush1.bf16.msra.mxu0 0
  %1733 = vmatprep.subr.bf16.mxu0 0
  %1734 = vmatpush1.bf16.msra.mxu0 0
  %1735 = vmatprep.subr.bf16.mxu0 0
  %1736 = vmatpush1.bf16.msra.mxu0 0
  %1737 = vmatprep.subr.bf16.mxu0 0
  %1738 = vmatpush1.bf16.msra.mxu0 0
  %1739 = vmatprep.subr.bf16.mxu0 0
  %1740 = vmatpush1.bf16.msra.mxu0 0
  %1741 = vmatprep.subr.bf16.mxu0 0
  %1742 = vmatpush1.bf16.msra.mxu0 0
  %1743 = vmatprep.subr.bf16.mxu0 0
  %1744 = vmatpush1.bf16.msra.mxu0 0
  %1745 = vmatprep.subr.bf16.mxu0 0
  %1746 = vmatpush1.bf16.msra.mxu0 0
  %1747 = vmatprep.subr.bf16.mxu0 0
  %1748 = vmatpush1.bf16.msra.mxu0 0
  %1749 = vmatprep.mubr.bf16.mxu0 0
  %1750 = vmatmul.mubr.bf16.gmra.mrb[0].mxu0 %v1377
  %v1751 = vpop.f32.mrb[0].mxu0
  %v1752 = vadd.f32 %v1703, %v1751
  %v1753 = vpop.f32.mrb[0].mxu0
  %v1754 = vpop.f32.mrb[0].mxu0
  %v1755 = vadd.f32 %v1706, %v1754
  %v1756 = vpop.f32.mrb[0].mxu0
  %1757 = vmatprep.mubr.bf16.mxu0 0
  %1758 = vmatmul.mubr.bf16.gmra.mrb[0].mxu0 %v1380
  %v1759 = vpop.f32.mrb[0].mxu0
  %v1760 = vadd.f32 %v1711, %v1759
  %v1761 = vpop.f32.mrb[0].mxu0
  %v1762 = vpop.f32.mrb[0].mxu0
  %v1763 = vadd.f32 %v1714, %v1762
  %v1764 = vpop.f32.mrb[0].mxu0
  %1765 = vdwg.mxu0
  %v1766 = vmax.f32 %v1470, %v1752
  %v1767 = vmax.f32 %v1473, %v1755
  %v1768 = vmax.f32 %v1478, %v1760
  %v1769 = vmax.f32 %v1481, %v1763
  %1770 = vrot.lane.b32.xlu0 %v1101, 72
  %v1771 = vpop.permute.xlu0 %1770
  %1772 = vrot.lane.b32.xlu0 %v1103, 72
  %v1773 = vpop.permute.xlu0 %1772
  %1774 = vrot.lane.b32.xlu0 %v1105, 72
  %v1775 = vpop.permute.xlu0 %1774
  %1776 = vrot.lane.b32.xlu0 %v1107, 72
  %v1777 = vpop.permute.xlu0 %1776
  %1782 = vrot.lane.b32.xlu0 %v1102, 16
  %v1783 = vpop.permute.xlu0 %1782
  %1784 = vrot.lane.b32.xlu0 %v1104, 16
  %v1785 = vpop.permute.xlu0 %1784
  %1786 = vrot.lane.b32.xlu0 %v1106, 16
  %v1787 = vpop.permute.xlu0 %1786
  %1788 = vrot.lane.b32.xlu0 %v1108, 16
  %v1789 = vpop.permute.xlu0 %1788
  %1794 = vrot.lane.b32.xlu0 %v1103, 88
  %v1795 = vpop.permute.xlu0 %1794
  %1796 = vrot.lane.b32.xlu0 %v1105, 88
  %v1797 = vpop.permute.xlu0 %1796
  %1798 = vrot.lane.b32.xlu0 %v1107, 88
  %v1799 = vpop.permute.xlu0 %1798
  %1800 = vrot.lane.b32.xlu0 %v1109, 88
  %v1801 = vpop.permute.xlu0 %1800
  %1807 = vrot.lane.b32.xlu0 %v1104, 32
  %v1808 = vpop.permute.xlu0 %1807
  %1809 = vrot.lane.b32.xlu0 %v1106, 32
  %v1810 = vpop.permute.xlu0 %1809
  %1811 = vrot.lane.b32.xlu0 %v1108, 32
  %v1812 = vpop.permute.xlu0 %1811
  %1813 = vrot.lane.b32.xlu0 %v1110, 32
  %v1814 = vpop.permute.xlu0 %1813
  %v1819 = vsel %vm1169, %v1100, %v1771
  %v1820 = vsel %vm1169, %v1102, %v1773
  %v1821 = vsel %vm1169, %v1104, %v1775
  %v1822 = vsel %vm1169, %v1106, %v1777
  %v1823 = vsel %vm1174, %v1771, %v1783
  %v1824 = vsel %vm1174, %v1773, %v1785
  %v1825 = vsel %vm1174, %v1775, %v1787
  %v1826 = vsel %vm1174, %v1777, %v1789
  %v1827 = vsel %vm1179, %v1823, %v1795
  %v1828 = vsel %vm1179, %v1824, %v1797
  %v1829 = vsel %vm1179, %v1825, %v1799
  %v1830 = vsel %vm1179, %v1826, %v1801
  %v1831 = vsel %vm1184, %v1795, %v1808
  %v1832 = vsel %vm1184, %v1797, %v1810
  %v1833 = vsel %vm1184, %v1799, %v1812
  %v1834 = vsel %vm1184, %v1801, %v1814
  %v1835 = vpack.c.bf16 %v1820, %v1819
  %v1836 = vpack.c.bf16 %v1828, %v1827
  %v1837 = vpack.c.bf16 %v1832, %v1831
  %v1838 = vpack.c.bf16 %v1822, %v1821
  %v1839 = vpack.c.bf16 %v1830, %v1829
  %v1840 = vpack.c.bf16 %v1834, %v1833
  %v1842 = vsel %vm1375, %v1837, 0
  %v1845 = vsel %vm1375, %v1840, 0
  %1847 = vmatprep.subr.bf16.mxu0 0
  %1848 = vmatpush1.bf16.msra.mxu0 %v1330
  %1849 = vmatprep.subr.bf16.mxu0 0
  %1850 = vmatpush1.bf16.msra.mxu0 %v1331
  %1851 = vmatprep.subr.bf16.mxu0 0
  %1852 = vmatpush1.bf16.msra.mxu0 %v1332
  %1853 = vmatprep.subr.bf16.mxu0 0
  %1854 = vmatpush1.bf16.msra.mxu0 %v1333
  %1855 = vmatprep.subr.bf16.mxu0 0
  %1856 = vmatpush1.bf16.msra.mxu0 %v1334
  %1857 = vmatprep.subr.bf16.mxu0 0
  %1858 = vmatpush1.bf16.msra.mxu0 %v1335
  %1859 = vmatprep.subr.bf16.mxu0 0
  %1860 = vmatpush1.bf16.msra.mxu0 %v1336
  %1861 = vmatprep.subr.bf16.mxu0 0
  %1862 = vmatpush1.bf16.msra.mxu0 %v1337
  %1863 = vmatprep.subr.bf16.mxu0 0
  %1864 = vmatpush1.bf16.msra.mxu0 %v1338
  %1865 = vmatprep.subr.bf16.mxu0 0
  %1866 = vmatpush1.bf16.msra.mxu0 %v1339
  %1867 = vmatprep.subr.bf16.mxu0 0
  %1868 = vmatpush1.bf16.msra.mxu0 %v1340
  %1869 = vmatprep.subr.bf16.mxu0 0
  %1870 = vmatpush1.bf16.msra.mxu0 %v1341
  %1871 = vmatprep.subr.bf16.mxu0 0
  %1872 = vmatpush1.bf16.msra.mxu0 %v1342
  %1873 = vmatprep.subr.bf16.mxu0 0
  %1874 = vmatpush1.bf16.msra.mxu0 %v1343
  %1875 = vmatprep.subr.bf16.mxu0 0
  %1876 = vmatpush1.bf16.msra.mxu0 %v1344
  %1877 = vmatprep.subr.bf16.mxu0 0
  %1878 = vmatpush1.bf16.msra.mxu0 %v1345
  %1879 = vmatprep.mubr.bf16.mxu0 %v1836
  %1880 = vmatmul.mubr.bf16.gmra.mrb[0].mxu0 %v1835
  %v1881 = vpop.f32.mrb[0].mxu0
  %v1882 = vadd.f32 0.0, %v1881
  %v1883 = vpop.f32.mrb[0].mxu0
  %v1884 = vpop.f32.mrb[0].mxu0
  %v1885 = vadd.f32 0.0, %v1884
  %v1886 = vpop.f32.mrb[0].mxu0
  %1887 = vmatprep.mubr.bf16.mxu0 %v1839
  %1888 = vmatmul.mubr.bf16.gmra.mrb[0].mxu0 %v1838
  %v1889 = vpop.f32.mrb[0].mxu0
  %v1890 = vadd.f32 0.0, %v1889
  %v1891 = vpop.f32.mrb[0].mxu0
  %v1892 = vpop.f32.mrb[0].mxu0
  %v1893 = vadd.f32 0.0, %v1892
  %v1894 = vpop.f32.mrb[0].mxu0
  %1895 = vdwg.mxu0
  %1896 = vmatprep.subr.bf16.mxu0 0
  %1897 = vmatpush1.bf16.msra.mxu0 %v1346
  %1898 = vmatprep.subr.bf16.mxu0 0
  %1899 = vmatpush1.bf16.msra.mxu0 %v1347
  %1900 = vmatprep.subr.bf16.mxu0 0
  %1901 = vmatpush1.bf16.msra.mxu0 %v1348
  %1902 = vmatprep.subr.bf16.mxu0 0
  %1903 = vmatpush1.bf16.msra.mxu0 %v1349
  %1904 = vmatprep.subr.bf16.mxu0 0
  %1905 = vmatpush1.bf16.msra.mxu0 %v1350
  %1906 = vmatprep.subr.bf16.mxu0 0
  %1907 = vmatpush1.bf16.msra.mxu0 %v1351
  %1908 = vmatprep.subr.bf16.mxu0 0
  %1909 = vmatpush1.bf16.msra.mxu0 %v1384
  %1910 = vmatprep.subr.bf16.mxu0 0
  %1911 = vmatpush1.bf16.msra.mxu0 0
  %1912 = vmatprep.subr.bf16.mxu0 0
  %1913 = vmatpush1.bf16.msra.mxu0 0
  %1914 = vmatprep.subr.bf16.mxu0 0
  %1915 = vmatpush1.bf16.msra.mxu0 0
  %1916 = vmatprep.subr.bf16.mxu0 0
  %1917 = vmatpush1.bf16.msra.mxu0 0
  %1918 = vmatprep.subr.bf16.mxu0 0
  %1919 = vmatpush1.bf16.msra.mxu0 0
  %1920 = vmatprep.subr.bf16.mxu0 0
  %1921 = vmatpush1.bf16.msra.mxu0 0
  %1922 = vmatprep.subr.bf16.mxu0 0
  %1923 = vmatpush1.bf16.msra.mxu0 0
  %1924 = vmatprep.subr.bf16.mxu0 0
  %1925 = vmatpush1.bf16.msra.mxu0 0
  %1926 = vmatprep.subr.bf16.mxu0 0
  %1927 = vmatpush1.bf16.msra.mxu0 0
  %1928 = vmatprep.mubr.bf16.mxu0 0
  %1929 = vmatmul.mubr.bf16.gmra.mrb[0].mxu0 %v1842
  %v1930 = vpop.f32.mrb[0].mxu0
  %v1931 = vadd.f32 %v1882, %v1930
  %v1932 = vpop.f32.mrb[0].mxu0
  %v1933 = vpop.f32.mrb[0].mxu0
  %v1934 = vadd.f32 %v1885, %v1933
  %v1935 = vpop.f32.mrb[0].mxu0
  %1936 = vmatprep.mubr.bf16.mxu0 0
  %1937 = vmatmul.mubr.bf16.gmra.mrb[0].mxu0 %v1845
  %v1938 = vpop.f32.mrb[0].mxu0
  %v1939 = vadd.f32 %v1890, %v1938
  %v1940 = vpop.f32.mrb[0].mxu0
  %v1941 = vpop.f32.mrb[0].mxu0
  %v1942 = vadd.f32 %v1893, %v1941
  %v1943 = vpop.f32.mrb[0].mxu0
  %1944 = vdwg.mxu0
  %v1945 = vmax.f32 %v1766, %v1931
  %v1946 = vmax.f32 %v1767, %v1934
  %v1947 = vmax.f32 %v1768, %v1939
  %v1948 = vmax.f32 %v1769, %v1942
  %1949 = vmatprep.subr.bf16.mxu0 0
  %1950 = vmatpush1.bf16.msra.mxu0 %v1620
  %1951 = vmatprep.subr.bf16.mxu0 0
  %1952 = vmatpush1.bf16.msra.mxu0 %v1621
  %1953 = vmatprep.subr.bf16.mxu0 0
  %1954 = vmatpush1.bf16.msra.mxu0 %v1622
  %1955 = vmatprep.subr.bf16.mxu0 0
  %1956 = vmatpush1.bf16.msra.mxu0 %v1623
  %1957 = vmatprep.subr.bf16.mxu0 0
  %1958 = vmatpush1.bf16.msra.mxu0 %v1624
  %1959 = vmatprep.subr.bf16.mxu0 0
  %1960 = vmatpush1.bf16.msra.mxu0 %v1625
  %1961 = vmatprep.subr.bf16.mxu0 0
  %1962 = vmatpush1.bf16.msra.mxu0 %v1626
  %1963 = vmatprep.subr.bf16.mxu0 0
  %1964 = vmatpush1.bf16.msra.mxu0 %v1627
  %1965 = vmatprep.subr.bf16.mxu0 0
  %1966 = vmatpush1.bf16.msra.mxu0 %v1628
  %1967 = vmatprep.subr.bf16.mxu0 0
  %1968 = vmatpush1.bf16.msra.mxu0 %v1629
  %1969 = vmatprep.subr.bf16.mxu0 0
  %1970 = vmatpush1.bf16.msra.mxu0 %v1630
  %1971 = vmatprep.subr.bf16.mxu0 0
  %1972 = vmatpush1.bf16.msra.mxu0 %v1631
  %1973 = vmatprep.subr.bf16.mxu0 0
  %1974 = vmatpush1.bf16.msra.mxu0 %v1632
  %1975 = vmatprep.subr.bf16.mxu0 0
  %1976 = vmatpush1.bf16.msra.mxu0 %v1633
  %1977 = vmatprep.subr.bf16.mxu0 0
  %1978 = vmatpush1.bf16.msra.mxu0 %v1634
  %1979 = vmatprep.subr.bf16.mxu0 0
  %1980 = vmatpush1.bf16.msra.mxu0 %v1635
  %1981 = vmatprep.mubr.bf16.mxu0 %v1836
  %1982 = vmatmul.mubr.bf16.gmra.mrb[0].mxu0 %v1835
  %v1983 = vpop.f32.mrb[0].mxu0
  %v1984 = vadd.f32 0.0, %v1983
  %v1985 = vpop.f32.mrb[0].mxu0
  %v1986 = vpop.f32.mrb[0].mxu0
  %v1987 = vadd.f32 0.0, %v1986
  %v1988 = vpop.f32.mrb[0].mxu0
  %1989 = vmatprep.mubr.bf16.mxu0 %v1839
  %1990 = vmatmul.mubr.bf16.gmra.mrb[0].mxu0 %v1838
  %v1991 = vpop.f32.mrb[0].mxu0
  %v1992 = vadd.f32 0.0, %v1991
  %v1993 = vpop.f32.mrb[0].mxu0
  %v1994 = vpop.f32.mrb[0].mxu0
  %v1995 = vadd.f32 0.0, %v1994
  %v1996 = vpop.f32.mrb[0].mxu0
  %1997 = vdwg.mxu0
  %1998 = vmatprep.subr.bf16.mxu0 0
  %1999 = vmatpush1.bf16.msra.mxu0 %v1636
  %2000 = vmatprep.subr.bf16.mxu0 0
  %2001 = vmatpush1.bf16.msra.mxu0 %v1637
  %2002 = vmatprep.subr.bf16.mxu0 0
  %2003 = vmatpush1.bf16.msra.mxu0 %v1638
  %2004 = vmatprep.subr.bf16.mxu0 0
  %2005 = vmatpush1.bf16.msra.mxu0 %v1639
  %2006 = vmatprep.subr.bf16.mxu0 0
  %2007 = vmatpush1.bf16.msra.mxu0 %v1640
  %2008 = vmatprep.subr.bf16.mxu0 0
  %2009 = vmatpush1.bf16.msra.mxu0 %v1641
  %2010 = vmatprep.subr.bf16.mxu0 0
  %2011 = vmatpush1.bf16.msra.mxu0 %v1666
  %2012 = vmatprep.subr.bf16.mxu0 0
  %2013 = vmatpush1.bf16.msra.mxu0 0
  %2014 = vmatprep.subr.bf16.mxu0 0
  %2015 = vmatpush1.bf16.msra.mxu0 0
  %2016 = vmatprep.subr.bf16.mxu0 0
  %2017 = vmatpush1.bf16.msra.mxu0 0
  %2018 = vmatprep.subr.bf16.mxu0 0
  %2019 = vmatpush1.bf16.msra.mxu0 0
  %2020 = vmatprep.subr.bf16.mxu0 0
  %2021 = vmatpush1.bf16.msra.mxu0 0
  %2022 = vmatprep.subr.bf16.mxu0 0
  %2023 = vmatpush1.bf16.msra.mxu0 0
  %2024 = vmatprep.subr.bf16.mxu0 0
  %2025 = vmatpush1.bf16.msra.mxu0 0
  %2026 = vmatprep.subr.bf16.mxu0 0
  %2027 = vmatpush1.bf16.msra.mxu0 0
  %2028 = vmatprep.subr.bf16.mxu0 0
  %2029 = vmatpush1.bf16.msra.mxu0 0
  %2030 = vmatprep.mubr.bf16.mxu0 0
  %2031 = vmatmul.mubr.bf16.gmra.mrb[0].mxu0 %v1842
  %v2032 = vpop.f32.mrb[0].mxu0
  %v2033 = vadd.f32 %v1984, %v2032
  %v2034 = vpop.f32.mrb[0].mxu0
  %v2035 = vpop.f32.mrb[0].mxu0
  %v2036 = vadd.f32 %v1987, %v2035
  %v2037 = vpop.f32.mrb[0].mxu0
  %2038 = vmatprep.mubr.bf16.mxu0 0
  %2039 = vmatmul.mubr.bf16.gmra.mrb[0].mxu0 %v1845
  %v2040 = vpop.f32.mrb[0].mxu0
  %v2041 = vadd.f32 %v1992, %v2040
  %v2042 = vpop.f32.mrb[0].mxu0
  %v2043 = vpop.f32.mrb[0].mxu0
  %v2044 = vadd.f32 %v1995, %v2043
  %v2045 = vpop.f32.mrb[0].mxu0
  %2046 = vdwg.mxu0
  %v2047 = vmax.f32 %v1945, %v2033
  %v2048 = vmax.f32 %v1946, %v2036
  %v2049 = vmax.f32 %v1947, %v2041
  %v2050 = vmax.f32 %v1948, %v2044
  %v2051 = vld [vmem:[%s4] sm:$0x1]
  %v2053 = vlaneseq
  %v2054 = vshrl.u32 %v2053, 7
  %v2055 = vsub.s32 0, %v2054
  %v2056 = vrot.slane %v2051, %v2055
  %v2058 = vadd.f32 %v2047, %v2056
  %v2059 = vadd.f32 %v2048, %v2056
  %v2060 = vadd.f32 %v2049, %v2056
  %v2061 = vadd.f32 %v2050, %v2056
  %v2062 = vmax.f32 %v2058, 0.0
  %v2063 = vmax.f32 %v2059, 0.0
  %v2064 = vmax.f32 %v2060, 0.0
  %v2065 = vmax.f32 %v2061, 0.0
  %2067 = vrot.lane.b32.xlu0 %v2063, 64
  %v2068 = vpop.permute.xlu0 %2067
  %2071 = vrot.lane.b32.xlu0 %v2065, 64
  %v2072 = vpop.permute.xlu0 %2071
  %vm2074 = vcmask 523264
  %v2075 = vsel %vm2074, %v2062, %v2068
  %v2076 = vsel %vm2074, %v2064, %v2072
  %v2077 = vpack.c.bf16 %v2075, %v2075
  %v2078 = vpack.c.bf16 %v2076, %v2076
  %v2079 = vld [vmem:[%s5] sm:$0xf]
  %v2080 = vld [vmem:[%s5 + $0x4] sm:$0xf]
  %v2081 = vld [vmem:[%s5 + $0x8] sm:$0xf]
  %v2082 = vld [vmem:[%s5 + $0xc] sm:$0xf]
  %v2083 = vld [vmem:[%s5 + $0x10] sm:$0xf]
  %v2084 = vld [vmem:[%s5 + $0x14] sm:$0xf]
  %v2085 = vld [vmem:[%s5 + $0x18] sm:$0xf]
  %v2086 = vld [vmem:[%s5 + $0x1c] sm:$0xf]
  %v2087 = vld [vmem:[%s5 + $0x20] sm:$0xf]
  %v2088 = vld [vmem:[%s5 + $0x24] sm:$0xf]
  %v2089 = vld [vmem:[%s5 + $0x28] sm:$0xf]
  %v2090 = vld [vmem:[%s5 + $0x2c] sm:$0xf]
  %v2091 = vld [vmem:[%s5 + $0x30] sm:$0xf]
  %v2092 = vld [vmem:[%s5 + $0x34] sm:$0xf]
  %v2093 = vld [vmem:[%s5 + $0x38] sm:$0xf]
  %v2094 = vld [vmem:[%s5 + $0x3c] sm:$0xf]
  %v2095 = vld [vmem:[%s5 + $0x40] sm:$0xf]
  %v2096 = vld [vmem:[%s5 + $0x44] sm:$0xf]
  %v2097 = vld [vmem:[%s5 + $0x48] sm:$0xf]
  %v2098 = vld [vmem:[%s5 + $0x4c] sm:$0xf]
  %v2099 = vld [vmem:[%s5 + $0x50] sm:$0xf]
  %v2100 = vld [vmem:[%s5 + $0x54] sm:$0xf]
  %v2101 = vld [vmem:[%s5 + $0x58] sm:$0xf]
  %v2102 = vld [vmem:[%s5 + $0x5c] sm:$0xf]
  %v2103 = vld [vmem:[%s5 + $0x60] sm:$0xf]
  %v2104 = vld [vmem:[%s5 + $0x64] sm:$0xf]
  %v2105 = vld [vmem:[%s5 + $0x68] sm:$0xf]
  %v2106 = vld [vmem:[%s5 + $0x6c] sm:$0xf]
  %v2107 = vld [vmem:[%s5 + $0x70] sm:$0xf]
  %v2108 = vld [vmem:[%s5 + $0x74] sm:$0xf]
  %v2109 = vld [vmem:[%s5 + $0x78] sm:$0xf]
  %v2110 = vld [vmem:[%s5 + $0x7c] sm:$0xf]
  %v2111 = vld [vmem:[%s6] sm:$0x1]
  %v2113 = vlaneseq
  %v2114 = vshrl.u32 %v2113, 7
  %v2115 = vsub.s32 0, %v2114
  %v2116 = vrot.slane %v2111, %v2115
  %v2150 = vunpack.c.l.b16 %v2079
  %v2151 = vunpack.c.l.b16 %v2080
  %v2152 = vunpack.c.l.b16 %v2081
  %v2153 = vunpack.c.l.b16 %v2082
  %v2154 = vunpack.c.l.b16 %v2083
  %v2155 = vunpack.c.l.b16 %v2084
  %v2156 = vunpack.c.l.b16 %v2085
  %v2157 = vunpack.c.l.b16 %v2086
  %v2158 = vunpack.c.l.b16 %v2087
  %v2159 = vunpack.c.l.b16 %v2088
  %v2160 = vunpack.c.l.b16 %v2089
  %v2161 = vunpack.c.l.b16 %v2090
  %v2162 = vunpack.c.l.b16 %v2091
  %v2163 = vunpack.c.l.b16 %v2092
  %v2164 = vunpack.c.l.b16 %v2093
  %v2165 = vunpack.c.l.b16 %v2094
  %v2166 = vunpack.c.l.b16 %v2095
  %v2167 = vunpack.c.l.b16 %v2096
  %v2168 = vunpack.c.l.b16 %v2097
  %v2169 = vunpack.c.l.b16 %v2098
  %v2170 = vunpack.c.l.b16 %v2099
  %v2171 = vunpack.c.l.b16 %v2100
  %v2172 = vunpack.c.l.b16 %v2101
  %v2173 = vunpack.c.l.b16 %v2102
  %v2174 = vunpack.c.l.b16 %v2103
  %v2175 = vunpack.c.l.b16 %v2104
  %v2176 = vunpack.c.l.b16 %v2105
  %v2177 = vunpack.c.l.b16 %v2106
  %v2178 = vunpack.c.l.b16 %v2107
  %v2179 = vunpack.c.l.b16 %v2108
  %v2180 = vunpack.c.l.b16 %v2109
  %v2181 = vunpack.c.l.b16 %v2110
  %v2182 = vpack.c.b16 %v2151, %v2150
  %v2183 = vpack.c.b16 %v2153, %v2152
  %v2184 = vpack.c.b16 %v2155, %v2154
  %v2185 = vpack.c.b16 %v2157, %v2156
  %v2186 = vpack.c.b16 %v2159, %v2158
  %v2187 = vpack.c.b16 %v2161, %v2160
  %v2188 = vpack.c.b16 %v2163, %v2162
  %v2189 = vpack.c.b16 %v2165, %v2164
  %v2190 = vpack.c.b16 %v2167, %v2166
  %v2191 = vpack.c.b16 %v2169, %v2168
  %v2192 = vpack.c.b16 %v2171, %v2170
  %v2193 = vpack.c.b16 %v2173, %v2172
  %v2194 = vpack.c.b16 %v2175, %v2174
  %v2195 = vpack.c.b16 %v2177, %v2176
  %v2196 = vpack.c.b16 %v2179, %v2178
  %v2197 = vpack.c.b16 %v2181, %v2180
  %2214 = vmatprep.subr.bf16.mxu0 0
  %2215 = vmatpush1.bf16.msra.mxu0 %v2182
  %2216 = vmatprep.subr.bf16.mxu0 0
  %2217 = vmatpush1.bf16.msra.mxu0 %v2183
  %2218 = vmatprep.subr.bf16.mxu0 0
  %2219 = vmatpush1.bf16.msra.mxu0 %v2184
  %2220 = vmatprep.subr.bf16.mxu0 0
  %2221 = vmatpush1.bf16.msra.mxu0 %v2185
  %2222 = vmatprep.subr.bf16.mxu0 0
  %2223 = vmatpush1.bf16.msra.mxu0 %v2186
  %2224 = vmatprep.subr.bf16.mxu0 0
  %2225 = vmatpush1.bf16.msra.mxu0 %v2187
  %2226 = vmatprep.subr.bf16.mxu0 0
  %2227 = vmatpush1.bf16.msra.mxu0 %v2188
  %2228 = vmatprep.subr.bf16.mxu0 0
  %2229 = vmatpush1.bf16.msra.mxu0 %v2189
  %2230 = vmatprep.subr.bf16.mxu0 0
  %2231 = vmatpush1.bf16.msra.mxu0 %v2190
  %2232 = vmatprep.subr.bf16.mxu0 0
  %2233 = vmatpush1.bf16.msra.mxu0 %v2191
  %2234 = vmatprep.subr.bf16.mxu0 0
  %2235 = vmatpush1.bf16.msra.mxu0 %v2192
  %2236 = vmatprep.subr.bf16.mxu0 0
  %2237 = vmatpush1.bf16.msra.mxu0 %v2193
  %2238 = vmatprep.subr.bf16.mxu0 0
  %2239 = vmatpush1.bf16.msra.mxu0 %v2194
  %2240 = vmatprep.subr.bf16.mxu0 0
  %2241 = vmatpush1.bf16.msra.mxu0 %v2195
  %2242 = vmatprep.subr.bf16.mxu0 0
  %2243 = vmatpush1.bf16.msra.mxu0 %v2196
  %2244 = vmatprep.subr.bf16.mxu0 0
  %2245 = vmatpush1.bf16.msra.mxu0 %v2197
  %2246 = vmatprep.mubr.bf16.mxu0 %v2078
  %2247 = vmatmul.mubr.bf16.gmra.mrb[0].mxu0 %v2077
  %v2248 = vpop.f32.mrb[0].mxu0
  %v2249 = vadd.f32 %v2116, %v2248
  %v2250 = vpop.f32.mrb[0].mxu0
  %v2251 = vpop.f32.mrb[0].mxu0
  %v2252 = vpop.f32.mrb[0].mxu0
  %2253 = vdwg.mxu0
  %v2254 = vmax.f32 %v2249, 0.0
  %v2255 = vpack.c.bf16 %v2254, %v2254
  %v2256 = vld [vmem:[%s7] sm:$0xf]
  %v2257 = vld [vmem:[%s7 + $0x4] sm:$0xf]
  %v2258 = vld [vmem:[%s7 + $0x8] sm:$0xf]
  %v2259 = vld [vmem:[%s7 + $0xc] sm:$0xf]
  %v2260 = vld [vmem:[%s7 + $0x10] sm:$0xf]
  %v2261 = vld [vmem:[%s7 + $0x14] sm:$0xf]
  %v2262 = vld [vmem:[%s7 + $0x18] sm:$0xf]
  %v2263 = vld [vmem:[%s7 + $0x1c] sm:$0xf]
  %v2264 = vld [vmem:[%s7 + $0x20] sm:$0xf]
  %v2265 = vld [vmem:[%s7 + $0x24] sm:$0xf]
  %v2266 = vld [vmem:[%s7 + $0x28] sm:$0xf]
  %v2267 = vld [vmem:[%s7 + $0x2c] sm:$0xf]
  %v2268 = vld [vmem:[%s7 + $0x30] sm:$0xf]
  %v2269 = vld [vmem:[%s7 + $0x34] sm:$0xf]
  %v2270 = vld [vmem:[%s7 + $0x38] sm:$0xf]
  %v2271 = vld [vmem:[%s7 + $0x3c] sm:$0xf]
  %v2272 = vld [vmem:[%s8] sm:$0x1]
  %v2274 = vlaneseq
  %v2275 = vshrl.u32 %v2274, 7
  %v2276 = vsub.s32 0, %v2275
  %v2277 = vrot.slane %v2272, %v2276
  %v2295 = vunpack.c.l.b16 %v2256
  %v2296 = vunpack.c.l.b16 %v2257
  %v2297 = vunpack.c.l.b16 %v2258
  %v2298 = vunpack.c.l.b16 %v2259
  %v2299 = vunpack.c.l.b16 %v2260
  %v2300 = vunpack.c.l.b16 %v2261
  %v2301 = vunpack.c.l.b16 %v2262
  %v2302 = vunpack.c.l.b16 %v2263
  %v2303 = vunpack.c.l.b16 %v2264
  %v2304 = vunpack.c.l.b16 %v2265
  %v2305 = vunpack.c.l.b16 %v2266
  %v2306 = vunpack.c.l.b16 %v2267
  %v2307 = vunpack.c.l.b16 %v2268
  %v2308 = vunpack.c.l.b16 %v2269
  %v2309 = vunpack.c.l.b16 %v2270
  %v2310 = vunpack.c.l.b16 %v2271
  %v2311 = vpack.c.b16 %v2296, %v2295
  %v2312 = vpack.c.b16 %v2298, %v2297
  %v2313 = vpack.c.b16 %v2300, %v2299
  %v2314 = vpack.c.b16 %v2302, %v2301
  %v2315 = vpack.c.b16 %v2304, %v2303
  %v2316 = vpack.c.b16 %v2306, %v2305
  %v2317 = vpack.c.b16 %v2308, %v2307
  %v2318 = vpack.c.b16 %v2310, %v2309
  %2327 = vmatprep.subr.bf16.mxu0 0
  %2328 = vmatpush1.bf16.msra.mxu0 %v2311
  %2329 = vmatprep.subr.bf16.mxu0 0
  %2330 = vmatpush1.bf16.msra.mxu0 %v2312
  %2331 = vmatprep.subr.bf16.mxu0 0
  %2332 = vmatpush1.bf16.msra.mxu0 %v2313
  %2333 = vmatprep.subr.bf16.mxu0 0
  %2334 = vmatpush1.bf16.msra.mxu0 %v2314
  %2335 = vmatprep.subr.bf16.mxu0 0
  %2336 = vmatpush1.bf16.msra.mxu0 %v2315
  %2337 = vmatprep.subr.bf16.mxu0 0
  %2338 = vmatpush1.bf16.msra.mxu0 %v2316
  %2339 = vmatprep.subr.bf16.mxu0 0
  %2340 = vmatpush1.bf16.msra.mxu0 %v2317
  %2341 = vmatprep.subr.bf16.mxu0 0
  %2342 = vmatpush1.bf16.msra.mxu0 %v2318
  %2343 = vmatprep.subr.bf16.mxu0 0
  %2344 = vmatpush1.bf16.msra.mxu0 0
  %2345 = vmatprep.subr.bf16.mxu0 0
  %2346 = vmatpush1.bf16.msra.mxu0 0
  %2347 = vmatprep.subr.bf16.mxu0 0
  %2348 = vmatpush1.bf16.msra.mxu0 0
  %2349 = vmatprep.subr.bf16.mxu0 0
  %2350 = vmatpush1.bf16.msra.mxu0 0
  %2351 = vmatprep.subr.bf16.mxu0 0
  %2352 = vmatpush1.bf16.msra.mxu0 0
  %2353 = vmatprep.subr.bf16.mxu0 0
  %2354 = vmatpush1.bf16.msra.mxu0 0
  %2355 = vmatprep.subr.bf16.mxu0 0
  %2356 = vmatpush1.bf16.msra.mxu0 0
  %2357 = vmatprep.subr.bf16.mxu0 0
  %2358 = vmatpush1.bf16.msra.mxu0 0
  %2359 = vmatprep.mubr.bf16.mxu0 0
  %2360 = vmatmul.mubr.bf16.gmra.mrb[0].mxu0 %v2255
  %v2361 = vpop.f32.mrb[0].mxu0
  %v2362 = vadd.f32 %v2277, %v2361
  %v2363 = vpop.f32.mrb[0].mxu0
  %v2364 = vpop.f32.mrb[0].mxu0
  %v2365 = vpop.f32.mrb[0].mxu0
  %2366 = vdwg.mxu0
  %v2367 = vmax.f32 %v2362, 0.0
  %v2368 = vpack.c.bf16 %v2367, %v2367
  %v2369 = vld [vmem:[%s9] sm:$0xf]
  %v2370 = vld [vmem:[%s9 + $0x4] sm:$0xf]
  %v2371 = vld [vmem:[%s9 + $0x8] sm:$0xf]
  %v2372 = vld [vmem:[%s9 + $0xc] sm:$0xf]
  %v2373 = vld [vmem:[%s9 + $0x10] sm:$0xf]
  %v2374 = vld [vmem:[%s9 + $0x14] sm:$0xf]
  %v2375 = vld [vmem:[%s9 + $0x18] sm:$0xf]
  %v2376 = vld [vmem:[%s9 + $0x1c] sm:$0xf]
  %v2377 = vld [vmem:[%s9 + $0x20] sm:$0xf]
  %v2378 = vld [vmem:[%s9 + $0x24] sm:$0xf]
  %v2379 = vld [vmem:[%s9 + $0x28] sm:$0xf]
  %v2380 = vld [vmem:[%s9 + $0x2c] sm:$0xf]
  %v2381 = vld [vmem:[%s9 + $0x30] sm:$0xf]
  %v2382 = vld [vmem:[%s9 + $0x34] sm:$0xf]
  %v2383 = vld [vmem:[%s9 + $0x38] sm:$0xf]
  %v2384 = vld [vmem:[%s9 + $0x3c] sm:$0xf]
  %v2385 = vld [vmem:[%s10] sm:$0x1]
  %v2387 = vlaneseq
  %v2388 = vshrl.u32 %v2387, 7
  %v2389 = vsub.s32 0, %v2388
  %v2390 = vrot.slane %v2385, %v2389
  %v2408 = vunpack.c.l.b16 %v2369
  %v2409 = vunpack.c.l.b16 %v2370
  %v2410 = vunpack.c.l.b16 %v2371
  %v2411 = vunpack.c.l.b16 %v2372
  %v2412 = vunpack.c.l.b16 %v2373
  %v2413 = vunpack.c.l.b16 %v2374
  %v2414 = vunpack.c.l.b16 %v2375
  %v2415 = vunpack.c.l.b16 %v2376
  %v2416 = vunpack.c.l.b16 %v2377
  %v2417 = vunpack.c.l.b16 %v2378
  %v2418 = vunpack.c.l.b16 %v2379
  %v2419 = vunpack.c.l.b16 %v2380
  %v2420 = vunpack.c.l.b16 %v2381
  %v2421 = vunpack.c.l.b16 %v2382
  %v2422 = vunpack.c.l.b16 %v2383
  %v2423 = vunpack.c.l.b16 %v2384
  %v2424 = vpack.c.b16 %v2409, %v2408
  %v2425 = vpack.c.b16 %v2411, %v2410
  %v2426 = vpack.c.b16 %v2413, %v2412
  %v2427 = vpack.c.b16 %v2415, %v2414
  %v2428 = vpack.c.b16 %v2417, %v2416
  %v2429 = vpack.c.b16 %v2419, %v2418
  %v2430 = vpack.c.b16 %v2421, %v2420
  %v2431 = vpack.c.b16 %v2423, %v2422
  %2440 = vmatprep.subr.bf16.mxu0 0
  %2441 = vmatpush1.bf16.msra.mxu0 %v2424
  %2442 = vmatprep.subr.bf16.mxu0 0
  %2443 = vmatpush1.bf16.msra.mxu0 %v2425
  %2444 = vmatprep.subr.bf16.mxu0 0
  %2445 = vmatpush1.bf16.msra.mxu0 %v2426
  %2446 = vmatprep.subr.bf16.mxu0 0
  %2447 = vmatpush1.bf16.msra.mxu0 %v2427
  %2448 = vmatprep.subr.bf16.mxu0 0
  %2449 = vmatpush1.bf16.msra.mxu0 %v2428
  %2450 = vmatprep.subr.bf16.mxu0 0
  %2451 = vmatpush1.bf16.msra.mxu0 %v2429
  %2452 = vmatprep.subr.bf16.mxu0 0
  %2453 = vmatpush1.bf16.msra.mxu0 %v2430
  %2454 = vmatprep.subr.bf16.mxu0 0
  %2455 = vmatpush1.bf16.msra.mxu0 %v2431
  %2456 = vmatprep.subr.bf16.mxu0 0
  %2457 = vmatpush1.bf16.msra.mxu0 0
  %2458 = vmatprep.subr.bf16.mxu0 0
  %2459 = vmatpush1.bf16.msra.mxu0 0
  %2460 = vmatprep.subr.bf16.mxu0 0
  %2461 = vmatpush1.bf16.msra.mxu0 0
  %2462 = vmatprep.subr.bf16.mxu0 0
  %2463 = vmatpush1.bf16.msra.mxu0 0
  %2464 = vmatprep.subr.bf16.mxu0 0
  %2465 = vmatpush1.bf16.msra.mxu0 0
  %2466 = vmatprep.subr.bf16.mxu0 0
  %2467 = vmatpush1.bf16.msra.mxu0 0
  %2468 = vmatprep.subr.bf16.mxu0 0
  %2469 = vmatpush1.bf16.msra.mxu0 0
  %2470 = vmatprep.subr.bf16.mxu0 0
  %2471 = vmatpush1.bf16.msra.mxu0 0
  %2472 = vmatprep.mubr.bf16.mxu0 0
  %2473 = vmatmul.mubr.bf16.gmra.mrb[0].mxu0 %v2368
  %v2474 = vpop.f32.mrb[0].mxu0
  %v2475 = vadd.f32 %v2390, %v2474
  %v2476 = vpop.f32.mrb[0].mxu0
  %v2477 = vpop.f32.mrb[0].mxu0
  %v2478 = vpop.f32.mrb[0].mxu0
  %2479 = vdwg.mxu0
  %2480 = vst [vmem:[%s11] sm:$0xff] %v2475
  // Predicated region
  $region46: #{net_forward.1} parent=0 // pred_check
    _
  $region47: #{net_forward.1} parent=0 // pred_check_branch
    %2482 = sbr.rel (0) target = $region49
  $region48: #{net_forward.1} parent=0 // pred_region
    _
  $region49: #{net_forward.1} parent=0 // pred_fallthru
    _
  // Predicated region
  $region50: #{net_forward.1} parent=0 // pred_check
    _
  $region51: #{net_forward.1} parent=0 // pred_check_branch
    %2484 = sbr.rel (0) target = $region53
  $region52: #{net_forward.1} parent=0 // pred_region
    _
  $region53: #{net_forward.1} parent=0 // pred_fallthru
    _

</llo_original>
